<compile_context>
chip_gen: v7x
topology: tpu7x:2x2x1
jax: 0.10.0
libtpu: 0.0.40
codegen_flags: <defaults>
</compile_context>

<pallas_src>
import functools

import jax
import jax.numpy as jnp
from jax.experimental import pallas as pl
from jax.experimental.pallas import tpu as pltpu

LN_EPS = 1e-5


def _round_up(a, b):
    return ((a + b - 1) // b) * b


def _layer_norm(h, gamma, beta):
    mu = jnp.mean(h, axis=-1, keepdims=True)
    var = jnp.mean((h - mu) ** 2, axis=-1, keepdims=True)
    return (h - mu) * jax.lax.rsqrt(var + LN_EPS) * gamma + beta


# ---------------------------------------------------------------------------
# Kernel
# ---------------------------------------------------------------------------
def dof9_encoder_kernel(
    x_ref,      # (tm, 9)
    w1_ref,     # (9, 3D)       block-diag of the three first Linears
    w2_ref,     # (3D, 3D)      block-diag of the three second Linears (LN1 affine folded)
    wout_ref,   # (3D + D, D)   rows [0:3D] = branch-sum+LN2-affine+output Linear1 folded,
                #               rows [3D:3D+D] = output Linear2 (output LN1 affine folded)
    bias_ref,   # (6, 3D)       row0=b1_cat, row1=b2_cat (3D wide),
                #               rows 2..5 (first D lanes) = bsum, bo2, final gamma, final beta
    out_ref,    # (tm, D)
):
    D = out_ref.shape[-1]
    D3 = w1_ref.shape[-1]

    # Block-diagonal ones/D matrix for per-branch (segmented) LN statistics on
    # the MXU.  Built in-kernel from iota + compares (cheap VPU work, no
    # integer division) instead of being DMA'd as an operand.
    r = jax.lax.broadcasted_iota(jnp.int32, (D3, D3), 0)
    c = jax.lax.broadcasted_iota(jnp.int32, (D3, D3), 1)
    seg_r = (r >= D).astype(jnp.int32) + (r >= 2 * D).astype(jnp.int32)
    seg_c = (c >= D).astype(jnp.int32) + (c >= 2 * D).astype(jnp.int32)
    mean3 = jnp.where(seg_r == seg_c, 1.0 / D, 0.0).astype(jnp.float32)

    def seg_ln(h):
        # Per-branch LayerNorm (no affine) on the lane-packed (tm, 3D) tensor.
        # The block-of-ones/D matmul broadcasts each segment's mean to every
        # lane of that segment; centered two-pass variance avoids cancellation.
        mu = jnp.dot(h, mean3, preferred_element_type=jnp.float32)
        d = h - mu
        var = jnp.dot(d * d, mean3, preferred_element_type=jnp.float32)
        return d * jax.lax.rsqrt(var + LN_EPS)

    def full_ln(h):
        # Full-width (D-wide) LayerNorm: plain cross-lane reduce on the XLU,
        # keeping the MXU for the real Linears only.
        mu = jnp.mean(h, axis=-1, keepdims=True)
        d = h - mu
        var = jnp.mean(d * d, axis=-1, keepdims=True)
        return d * jax.lax.rsqrt(var + LN_EPS)

    x = x_ref[...].astype(jnp.float32)

    # pos / size / yaw branches, lane-packed into one (tm, 3D) activation.
    h = jnp.dot(x, w1_ref[...], preferred_element_type=jnp.float32) + bias_ref[0:1, :]
    h = seg_ln(jnp.maximum(h, 0.0))
    h = jnp.dot(h, w2_ref[...], preferred_element_type=jnp.float32) + bias_ref[1:2, :]
    h = seg_ln(jnp.maximum(h, 0.0))

    # Branch sum + output_fc first Linear (sum and LN affines folded into wout rows 0:3D).
    h = (jnp.dot(h, wout_ref[0:D3, :], preferred_element_type=jnp.float32)
         + bias_ref[2:3, 0:D])
    h = full_ln(jnp.maximum(h, 0.0))
    # output_fc second Linear (output LN1 affine folded into wout rows 3D:3D+D).
    h = (jnp.dot(h, wout_ref[D3:D3 + D, :], preferred_element_type=jnp.float32)
         + bias_ref[3:4, 0:D])
    h = full_ln(jnp.maximum(h, 0.0))

    # Final LayerNorm affine (no following Linear to fold into).
    out_ref[...] = (h * bias_ref[4:5, 0:D] + bias_ref[5:6, 0:D]).astype(out_ref.dtype)


# ---------------------------------------------------------------------------
# Parameters (PyTorch-shaped, transposed for x @ W) + trace-time fusion
# ---------------------------------------------------------------------------
def init_params(key, embed_dims=32, rot_dims=3):
    D = embed_dims
    ks = jax.random.split(key, 8)

    def lin(k, fan_in, fan_out):
        bound = 1.0 / jnp.sqrt(jnp.float32(fan_in))
        kw, kb = jax.random.split(k)
        W = jax.random.uniform(kw, (fan_in, fan_out), jnp.float32, -bound, bound)
        b = jax.random.uniform(kb, (fan_out,), jnp.float32, -bound, bound)
        return W, b

    W1s, b1s, W2s, b2s = [], [], [], []
    in_dims = [3, 3, rot_dims]
    for i in range(3):
        W1, b1 = lin(ks[2 * i], in_dims[i], D)
        W2, b2 = lin(ks[2 * i + 1], D, D)
        W1s.append(W1); b1s.append(b1); W2s.append(W2); b2s.append(b2)

    Wo1, bo1 = lin(ks[6], D, D)
    Wo2, bo2 = lin(ks[7], D, D)

    ones3 = jnp.ones((3, 1, D), jnp.float32)
    zeros3 = jnp.zeros((3, 1, D), jnp.float32)
    return dict(
        W1=jnp.stack(W1s), b1=jnp.stack(b1s)[:, None, :], g1=ones3, be1=zeros3,
        W2=jnp.stack(W2s), b2=jnp.stack(b2s)[:, None, :], g2=ones3, be2=zeros3,
        Wo1=Wo1, bo1=bo1[None, :],
        go1=jnp.ones((1, D), jnp.float32), beo1=jnp.zeros((1, D), jnp.float32),
        Wo2=Wo2, bo2=bo2[None, :],
        go2=jnp.ones((1, D), jnp.float32), beo2=jnp.zeros((1, D), jnp.float32),
    )


def fuse_params(p):
    """Build block-diagonal lane-packed weights, fold every LN affine that is
    followed by a Linear into that Linear, and pack the small tensors into a
    handful of operands.  Runs once, outside the kernel."""
    D = p["Wo2"].shape[0]
    D3 = 3 * D
    W1, b1 = p["W1"], p["b1"][:, 0]
    g1, be1 = p["g1"][:, 0], p["be1"][:, 0]
    W2, b2 = p["W2"], p["b2"][:, 0]
    g2, be2 = p["g2"][:, 0], p["be2"][:, 0]
    Wo1, bo1 = p["Wo1"], p["bo1"][0]
    go1, beo1 = p["go1"][0], p["beo1"][0]
    Wo2, bo2 = p["Wo2"], p["bo2"][0]
    go2, beo2 = p["go2"][0], p["beo2"][0]

    w1_bd = jnp.zeros((9, D3), jnp.float32)
    w2_bd = jnp.zeros((D3, D3), jnp.float32)
    b2_rows = []
    for i in range(3):
        w1_bd = w1_bd.at[3 * i:3 * i + 3, i * D:(i + 1) * D].set(W1[i])
        # fold branch LN1 affine (g1, be1) into the branch's second Linear
        w2_bd = w2_bd.at[i * D:(i + 1) * D, i * D:(i + 1) * D].set(g1[i][:, None] * W2[i])
        b2_rows.append(be1[i] @ W2[i] + b2[i])
    b1_cat = b1.reshape(D3)
    b2_cat = jnp.concatenate(b2_rows)

    # fold branch LN2 affine + branch sum + output_fc first Linear
    wsum = jnp.concatenate([g2[i][:, None] * Wo1 for i in range(3)], axis=0)   # (3D, D)
    bsum = be2.sum(axis=0) @ Wo1 + bo1                                         # (D,)

    # fold output_fc LN1 affine into output_fc second Linear
    wo2_f = go1[:, None] * Wo2
    bo2_f = beo1 @ Wo2 + bo2

    # Pack the two output-path matmuls into one operand (8-aligned row split).
    wout = jnp.concatenate([wsum, wo2_f], axis=0)                              # (3D + D, D)

    def pad_to_d3(v):
        return jnp.pad(v, (0, D3 - D))

    bias = jnp.stack([b1_cat, b2_cat,
                      pad_to_d3(bsum), pad_to_d3(bo2_f),
                      pad_to_d3(go2), pad_to_d3(beo2)])                        # (6, 3D)

    return dict(w1=w1_bd, w2=w2_bd, wout=wout, bias=bias)


# ---------------------------------------------------------------------------
# pallas_call wrapper
# ---------------------------------------------------------------------------
@functools.partial(jax.jit, static_argnames=("tile_m",))
def _dof9_pallas(x, fp, *, tile_m):
    M, C = x.shape
    D = fp["wout"].shape[-1]
    D3 = fp["w1"].shape[-1]

    weights = [fp["w1"], fp["w2"], fp["wout"], fp["bias"]]

    in_specs = [pl.BlockSpec((tile_m, C), lambda i: (i, 0))]
    # Every weight is a single full block, resident in VMEM across the grid.
    in_specs += [pl.BlockSpec(w.shape, lambda i: (0, 0)) for w in weights]

    flops_per_row = (2 * (C * D3 + D3 * D3 + D3 * D + D * D)   # real Linears
                     + 4 * 2 * D3 * D3)                        # segmented-LN stats matmuls
    cost = pl.CostEstimate(
        flops=int(M * flops_per_row),
        transcendentals=int(M * (2 * D3 + 2)),
        bytes_accessed=int(4 * (x.size + M * D + sum(w.size for w in weights))),
    )

    return pl.pallas_call(
        dof9_encoder_kernel,
        out_shape=jax.ShapeDtypeStruct((M, D), jnp.float32),
        grid_spec=pl.GridSpec(
            grid=(pl.cdiv(M, tile_m),),
            in_specs=in_specs,
            out_specs=pl.BlockSpec((tile_m, D), lambda i: (i, 0)),
        ),
        compiler_params=pltpu.CompilerParams(
            dimension_semantics=("parallel",),
        ),
        cost_estimate=cost,
    )(x, *weights)


def dof9_box_encoder(box_3d, fused_params, *, tile_m=None):
    # TODO(synk): the 3-DoF (pos-only early return) path and rot_dims != 3 of the
    # original module are not handled by this fused 9-DoF kernel.
    B, N, C = box_3d.shape
    assert C == 9, "this kernel implements the full 9-DoF path"
    M = B * N
    D = fused_params["wout"].shape[-1]

    if tile_m is None:
        # Aim for >= 2 grid steps (so the "parallel" axis can shard rows across
        # both v7x TensorCores) while capping rows/step at 1024.  Never exceed
        # the (8-rounded) row count.  v5e: sweep tile_m in 256-512.
        tile_m = min(1024, max(256, _round_up((M + 1) // 2, 8)))
        tile_m = min(tile_m, _round_up(M, 8))

    # No wrapper-side padding: grid uses cdiv; the partial last block's padded
    # rows are computed row-wise and their writes are dropped by Pallas.
    x = box_3d.reshape(M, C).astype(jnp.float32)
    out = _dof9_pallas(x, fused_params, tile_m=tile_m)
    return out.reshape(B, N, D)


# ---------------------------------------------------------------------------
# Pure-JAX reference of the PyTorch module (uses the un-fused params)
# ---------------------------------------------------------------------------
def ref_forward(box_3d, p):
    def mlp(x, W1, b1, g1, be1, W2, b2, g2, be2):
        h = jnp.maximum(x @ W1 + b1, 0.0)
        h = _layer_norm(h, g1, be1)
        h = jnp.maximum(h @ W2 + b2, 0.0)
        h = _layer_norm(h, g2, be2)
        return h

    def branch(x, i):
        return mlp(x, p["W1"][i], p["b1"][i, 0], p["g1"][i, 0], p["be1"][i, 0],
                   p["W2"][i], p["b2"][i, 0], p["g2"][i, 0], p["be2"][i, 0])

    pos = branch(box_3d[..., 0:3], 0)
    size = branch(box_3d[..., 3:6], 1)
    yaw = branch(box_3d[..., 6:9], 2)
    out = pos + size + yaw
    out = mlp(out, p["Wo1"], p["bo1"][0], p["go1"][0], p["beo1"][0],
              p["Wo2"], p["bo2"][0], p["go2"][0], p["beo2"][0])
    return out


if __name__ == "__main__":
    key = jax.random.PRNGKey(0)
    k_box, k_params = jax.random.split(key)

    B, N, EMBED = 2, 64, 32            # 2 batches, 64 anchors, embed_dims=32
    box_3d = jax.random.normal(k_box, (B, N, 9), jnp.float32)
    params = init_params(k_params, embed_dims=EMBED, rot_dims=3)
    fused = fuse_params(params)

    out = dof9_box_encoder(box_3d, fused)
    out = jax.block_until_ready(out)

    ref = ref_forward(box_3d, params)
    assert out.shape == (B, N, EMBED)
    err = float(jnp.max(jnp.abs(out - ref)))
    assert jnp.allclose(out, ref, atol=1e-3, rtol=1e-3), f"mismatch vs reference, max|err|={err}"

    print("KERNEL_OK")
</pallas_src>

<mosaic_0001>
module attributes {stable_mosaic.version = 11 : i64} {
  func.func @dof9_encoder_kernel(%arg0: i32, %arg1: memref<128x9xf32, #tpu.memory_space<vmem>>, %arg2: memref<9x96xf32, #tpu.memory_space<vmem>>, %arg3: memref<96x96xf32, #tpu.memory_space<vmem>>, %arg4: memref<128x32xf32, #tpu.memory_space<vmem>>, %arg5: memref<6x96xf32, #tpu.memory_space<vmem>>, %arg6: memref<128x32xf32, #tpu.memory_space<vmem>>) attributes {dimension_semantics = [#tpu.dimension_semantics<parallel>], iteration_bounds = array<i64: 1>, scalar_prefetch = 0 : i64, scratch_operands = 0 : i64, tpu.core_type = #tpu.core_type<tc>, window_params = [{transform_indices = @transform_0, window_bounds = array<i64: 128, 9>}, {pipeline_mode = #tpu.pipeline_mode<synchronous>, transform_indices = @transform_1, window_bounds = array<i64: 9, 96>}, {pipeline_mode = #tpu.pipeline_mode<synchronous>, transform_indices = @transform_2, window_bounds = array<i64: 96, 96>}, {pipeline_mode = #tpu.pipeline_mode<synchronous>, transform_indices = @transform_3, window_bounds = array<i64: 128, 32>}, {pipeline_mode = #tpu.pipeline_mode<synchronous>, transform_indices = @transform_4, window_bounds = array<i64: 6, 96>}, {transform_indices = @transform_5, window_bounds = array<i64: 128, 32>}]} {
    %0 = tpu.iota {dimensions = array<i32: 0>} : vector<96x96xi32>
    %1 = tpu.iota {dimensions = array<i32: 1>} : vector<96x96xi32>
    %c32_i32 = arith.constant 32 : i32
    %2 = vector.broadcast %c32_i32 : i32 to vector<96x96xi32>
    %3 = arith.cmpi sge, %0, %2 : vector<96x96xi32>
    %4 = arith.extui %3 : vector<96x96xi1> to vector<96x96xi32>
    %c64_i32 = arith.constant 64 : i32
    %5 = vector.broadcast %c64_i32 : i32 to vector<96x96xi32>
    %6 = arith.cmpi sge, %0, %5 : vector<96x96xi32>
    %7 = arith.extui %6 : vector<96x96xi1> to vector<96x96xi32>
    %8 = arith.addi %4, %7 : vector<96x96xi32>
    %c32_i32_0 = arith.constant 32 : i32
    %9 = vector.broadcast %c32_i32_0 : i32 to vector<96x96xi32>
    %10 = arith.cmpi sge, %1, %9 : vector<96x96xi32>
    %11 = arith.extui %10 : vector<96x96xi1> to vector<96x96xi32>
    %c64_i32_1 = arith.constant 64 : i32
    %12 = vector.broadcast %c64_i32_1 : i32 to vector<96x96xi32>
    %13 = arith.cmpi sge, %1, %12 : vector<96x96xi32>
    %14 = arith.extui %13 : vector<96x96xi1> to vector<96x96xi32>
    %15 = arith.addi %11, %14 : vector<96x96xi32>
    %16 = arith.cmpi eq, %8, %15 : vector<96x96xi32>
    %cst = arith.constant 3.125000e-02 : f32
    %cst_2 = arith.constant 0.000000e+00 : f32
    %17 = vector.broadcast %cst : f32 to vector<96x96xf32>
    %18 = vector.broadcast %cst_2 : f32 to vector<96x96xf32>
    %19 = arith.select %16, %17, %18 : vector<96x96xi1>, vector<96x96xf32>
    %c0 = arith.constant 0 : index
    %c0_3 = arith.constant 0 : index
    %20 = vector.load %arg1[%c0, %c0_3] : memref<128x9xf32, #tpu.memory_space<vmem>>, vector<128x9xf32>
    %c0_4 = arith.constant 0 : index
    %c0_5 = arith.constant 0 : index
    %21 = vector.load %arg2[%c0_4, %c0_5] : memref<9x96xf32, #tpu.memory_space<vmem>>, vector<9x96xf32>
    %cst_6 = arith.constant dense<0.000000e+00> : vector<128x96xf32>
    %22 = tpu.matmul %20, %21, %cst_6 {dimension_numbers = #tpu.dot_dimension_numbers<[1], [0], [0], [1], [0, 0, 1, 1], [], []>} : vector<128x9xf32>, vector<9x96xf32>, vector<128x96xf32> -> vector<128x96xf32>
    %c0_7 = arith.constant 0 : index
    %c0_8 = arith.constant 0 : index
    %23 = vector.load %arg5[%c0_7, %c0_8] : memref<6x96xf32, #tpu.memory_space<vmem>>, vector<1x96xf32>
    %24 = vector.broadcast %23 : vector<1x96xf32> to vector<128x96xf32>
    %25 = arith.addf %22, %24 : vector<128x96xf32>
    %cst_9 = arith.constant 0.000000e+00 : f32
    %26 = vector.broadcast %cst_9 : f32 to vector<128x96xf32>
    %27 = arith.maximumf %25, %26 : vector<128x96xf32>
    %cst_10 = arith.constant dense<0.000000e+00> : vector<128x96xf32>
    %28 = tpu.matmul %27, %19, %cst_10 {dimension_numbers = #tpu.dot_dimension_numbers<[1], [0], [0], [1], [0, 0, 1, 1], [], []>} : vector<128x96xf32>, vector<96x96xf32>, vector<128x96xf32> -> vector<128x96xf32>
    %29 = arith.subf %27, %28 : vector<128x96xf32>
    %30 = arith.mulf %29, %29 : vector<128x96xf32>
    %cst_11 = arith.constant dense<0.000000e+00> : vector<128x96xf32>
    %31 = tpu.matmul %30, %19, %cst_11 {dimension_numbers = #tpu.dot_dimension_numbers<[1], [0], [0], [1], [0, 0, 1, 1], [], []>} : vector<128x96xf32>, vector<96x96xf32>, vector<128x96xf32> -> vector<128x96xf32>
    %cst_12 = arith.constant 9.99999974E-6 : f32
    %32 = vector.broadcast %cst_12 : f32 to vector<128x96xf32>
    %33 = arith.addf %31, %32 : vector<128x96xf32>
    %34 = math.rsqrt %33 : vector<128x96xf32>
    %35 = arith.mulf %29, %34 : vector<128x96xf32>
    %c0_13 = arith.constant 0 : index
    %c0_14 = arith.constant 0 : index
    %36 = vector.load %arg3[%c0_13, %c0_14] : memref<96x96xf32, #tpu.memory_space<vmem>>, vector<96x96xf32>
    %cst_15 = arith.constant dense<0.000000e+00> : vector<128x96xf32>
    %37 = tpu.matmul %35, %36, %cst_15 {dimension_numbers = #tpu.dot_dimension_numbers<[1], [0], [0], [1], [0, 0, 1, 1], [], []>} : vector<128x96xf32>, vector<96x96xf32>, vector<128x96xf32> -> vector<128x96xf32>
    %c1 = arith.constant 1 : index
    %c0_16 = arith.constant 0 : index
    %38 = vector.load %arg5[%c1, %c0_16] : memref<6x96xf32, #tpu.memory_space<vmem>>, vector<1x96xf32>
    %39 = vector.broadcast %38 : vector<1x96xf32> to vector<128x96xf32>
    %40 = arith.addf %37, %39 : vector<128x96xf32>
    %cst_17 = arith.constant 0.000000e+00 : f32
    %41 = vector.broadcast %cst_17 : f32 to vector<128x96xf32>
    %42 = arith.maximumf %40, %41 : vector<128x96xf32>
    %cst_18 = arith.constant dense<0.000000e+00> : vector<128x96xf32>
    %43 = tpu.matmul %42, %19, %cst_18 {dimension_numbers = #tpu.dot_dimension_numbers<[1], [0], [0], [1], [0, 0, 1, 1], [], []>} : vector<128x96xf32>, vector<96x96xf32>, vector<128x96xf32> -> vector<128x96xf32>
    %44 = arith.subf %42, %43 : vector<128x96xf32>
    %45 = arith.mulf %44, %44 : vector<128x96xf32>
    %cst_19 = arith.constant dense<0.000000e+00> : vector<128x96xf32>
    %46 = tpu.matmul %45, %19, %cst_19 {dimension_numbers = #tpu.dot_dimension_numbers<[1], [0], [0], [1], [0, 0, 1, 1], [], []>} : vector<128x96xf32>, vector<96x96xf32>, vector<128x96xf32> -> vector<128x96xf32>
    %cst_20 = arith.constant 9.99999974E-6 : f32
    %47 = vector.broadcast %cst_20 : f32 to vector<128x96xf32>
    %48 = arith.addf %46, %47 : vector<128x96xf32>
    %49 = math.rsqrt %48 : vector<128x96xf32>
    %50 = arith.mulf %44, %49 : vector<128x96xf32>
    %c0_21 = arith.constant 0 : index
    %c0_22 = arith.constant 0 : index
    %51 = vector.load %arg4[%c0_21, %c0_22] : memref<128x32xf32, #tpu.memory_space<vmem>>, vector<96x32xf32>
    %cst_23 = arith.constant dense<0.000000e+00> : vector<128x32xf32>
    %52 = tpu.matmul %50, %51, %cst_23 {dimension_numbers = #tpu.dot_dimension_numbers<[1], [0], [0], [1], [0, 0, 1, 1], [], []>} : vector<128x96xf32>, vector<96x32xf32>, vector<128x32xf32> -> vector<128x32xf32>
    %c2 = arith.constant 2 : index
    %c0_24 = arith.constant 0 : index
    %53 = vector.load %arg5[%c2, %c0_24] : memref<6x96xf32, #tpu.memory_space<vmem>>, vector<1x32xf32>
    %54 = vector.broadcast %53 : vector<1x32xf32> to vector<128x32xf32>
    %55 = arith.addf %52, %54 : vector<128x32xf32>
    %cst_25 = arith.constant 0.000000e+00 : f32
    %56 = vector.broadcast %cst_25 : f32 to vector<128x32xf32>
    %57 = arith.maximumf %55, %56 : vector<128x32xf32>
    %cst_26 = arith.constant dense<0.000000e+00> : vector<128xf32>
    %58 = vector.multi_reduction <add>, %57, %cst_26 [1] : vector<128x32xf32> to vector<128xf32>
    %59 = vector.shape_cast %58 : vector<128xf32> to vector<128x1xf32>
    %cst_27 = arith.constant 3.200000e+01 : f32
    %60 = vector.broadcast %cst_27 : f32 to vector<128x1xf32>
    %61 = arith.divf %59, %60 : vector<128x1xf32>
    %62 = vector.broadcast %61 : vector<128x1xf32> to vector<128x32xf32>
    %63 = arith.subf %57, %62 : vector<128x32xf32>
    %64 = arith.mulf %63, %63 : vector<128x32xf32>
    %cst_28 = arith.constant dense<0.000000e+00> : vector<128xf32>
    %65 = vector.multi_reduction <add>, %64, %cst_28 [1] : vector<128x32xf32> to vector<128xf32>
    %66 = vector.shape_cast %65 : vector<128xf32> to vector<128x1xf32>
    %cst_29 = arith.constant 3.200000e+01 : f32
    %67 = vector.broadcast %cst_29 : f32 to vector<128x1xf32>
    %68 = arith.divf %66, %67 : vector<128x1xf32>
    %cst_30 = arith.constant 9.99999974E-6 : f32
    %69 = vector.broadcast %cst_30 : f32 to vector<128x1xf32>
    %70 = arith.addf %68, %69 : vector<128x1xf32>
    %71 = math.rsqrt %70 : vector<128x1xf32>
    %72 = vector.broadcast %71 : vector<128x1xf32> to vector<128x32xf32>
    %73 = arith.mulf %63, %72 : vector<128x32xf32>
    %c96 = arith.constant 96 : index
    %c0_31 = arith.constant 0 : index
    %74 = vector.load %arg4[%c96, %c0_31] : memref<128x32xf32, #tpu.memory_space<vmem>>, vector<32x32xf32>
    %cst_32 = arith.constant dense<0.000000e+00> : vector<128x32xf32>
    %75 = tpu.matmul %73, %74, %cst_32 {dimension_numbers = #tpu.dot_dimension_numbers<[1], [0], [0], [1], [0, 0, 1, 1], [], []>} : vector<128x32xf32>, vector<32x32xf32>, vector<128x32xf32> -> vector<128x32xf32>
    %c3 = arith.constant 3 : index
    %c0_33 = arith.constant 0 : index
    %76 = vector.load %arg5[%c3, %c0_33] : memref<6x96xf32, #tpu.memory_space<vmem>>, vector<1x32xf32>
    %77 = vector.broadcast %76 : vector<1x32xf32> to vector<128x32xf32>
    %78 = arith.addf %75, %77 : vector<128x32xf32>
    %cst_34 = arith.constant 0.000000e+00 : f32
    %79 = vector.broadcast %cst_34 : f32 to vector<128x32xf32>
    %80 = arith.maximumf %78, %79 : vector<128x32xf32>
    %cst_35 = arith.constant dense<0.000000e+00> : vector<128xf32>
    %81 = vector.multi_reduction <add>, %80, %cst_35 [1] : vector<128x32xf32> to vector<128xf32>
    %82 = vector.shape_cast %81 : vector<128xf32> to vector<128x1xf32>
    %cst_36 = arith.constant 3.200000e+01 : f32
    %83 = vector.broadcast %cst_36 : f32 to vector<128x1xf32>
    %84 = arith.divf %82, %83 : vector<128x1xf32>
    %85 = vector.broadcast %84 : vector<128x1xf32> to vector<128x32xf32>
    %86 = arith.subf %80, %85 : vector<128x32xf32>
    %87 = arith.mulf %86, %86 : vector<128x32xf32>
    %cst_37 = arith.constant dense<0.000000e+00> : vector<128xf32>
    %88 = vector.multi_reduction <add>, %87, %cst_37 [1] : vector<128x32xf32> to vector<128xf32>
    %89 = vector.shape_cast %88 : vector<128xf32> to vector<128x1xf32>
    %cst_38 = arith.constant 3.200000e+01 : f32
    %90 = vector.broadcast %cst_38 : f32 to vector<128x1xf32>
    %91 = arith.divf %89, %90 : vector<128x1xf32>
    %cst_39 = arith.constant 9.99999974E-6 : f32
    %92 = vector.broadcast %cst_39 : f32 to vector<128x1xf32>
    %93 = arith.addf %91, %92 : vector<128x1xf32>
    %94 = math.rsqrt %93 : vector<128x1xf32>
    %95 = vector.broadcast %94 : vector<128x1xf32> to vector<128x32xf32>
    %96 = arith.mulf %86, %95 : vector<128x32xf32>
    %c4 = arith.constant 4 : index
    %c0_40 = arith.constant 0 : index
    %97 = vector.load %arg5[%c4, %c0_40] : memref<6x96xf32, #tpu.memory_space<vmem>>, vector<1x32xf32>
    %98 = vector.broadcast %97 : vector<1x32xf32> to vector<128x32xf32>
    %99 = arith.mulf %96, %98 : vector<128x32xf32>
    %c5 = arith.constant 5 : index
    %c0_41 = arith.constant 0 : index
    %100 = vector.load %arg5[%c5, %c0_41] : memref<6x96xf32, #tpu.memory_space<vmem>>, vector<1x32xf32>
    %101 = vector.broadcast %100 : vector<1x32xf32> to vector<128x32xf32>
    %102 = arith.addf %99, %101 : vector<128x32xf32>
    %c0_42 = arith.constant 0 : index
    %c0_43 = arith.constant 0 : index
    %103 = vector.load %arg6[%c0_42, %c0_43] : memref<128x32xf32, #tpu.memory_space<vmem>>, vector<128x32xf32>
    tpu.vector_store %arg6[%c0_42, %c0_43], %102 {strides = array<i32>} : memref<128x32xf32, #tpu.memory_space<vmem>>, vector<128x32xf32>,
    return
  }
  func.func @transform_0(%arg0: i32) -> (i32, i32) {
    %c0_i32 = arith.constant 0 : i32
    %c0_i32_0 = arith.constant 0 : i32
    return %arg0, %c0_i32 : i32, i32
  }
  func.func @transform_1(%arg0: i32) -> (i32, i32) {
    %c0_i32 = arith.constant 0 : i32
    %c0_i32_0 = arith.constant 0 : i32
    %c0_i32_1 = arith.constant 0 : i32
    return %c0_i32, %c0_i32_0 : i32, i32
  }
  func.func @transform_2(%arg0: i32) -> (i32, i32) {
    %c0_i32 = arith.constant 0 : i32
    %c0_i32_0 = arith.constant 0 : i32
    %c0_i32_1 = arith.constant 0 : i32
    return %c0_i32, %c0_i32_0 : i32, i32
  }
  func.func @transform_3(%arg0: i32) -> (i32, i32) {
    %c0_i32 = arith.constant 0 : i32
    %c0_i32_0 = arith.constant 0 : i32
    %c0_i32_1 = arith.constant 0 : i32
    return %c0_i32, %c0_i32_0 : i32, i32
  }
  func.func @transform_4(%arg0: i32) -> (i32, i32) {
    %c0_i32 = arith.constant 0 : i32
    %c0_i32_0 = arith.constant 0 : i32
    %c0_i32_1 = arith.constant 0 : i32
    return %c0_i32, %c0_i32_0 : i32, i32
  }
  func.func @transform_5(%arg0: i32) -> (i32, i32) {
    %c0_i32 = arith.constant 0 : i32
    %c0_i32_0 = arith.constant 0 : i32
    return %arg0, %c0_i32 : i32, i32
  }
}

</mosaic_0001>

<llo_original>
// kernel: _dof9_pallas.1
$region0: #{_dof9_pallas.1}
  #allocation0 [shape = 'u32[]', space=smem, size = 0x4, offset = 0x4, fixed_abs, tag = 'smem constant byte address 0x4 - core index']
  #allocation1 [shape = 'u32[144,128]{1,0:T(1,128)}', space=vmem, size = 0x12000, scoped, tag = 'internal scratch']
  %s0 = inlined_call_operand.vmem [shape: f32[128,9], index: 0, kind: input, shape index: {}]
  %s1 = inlined_call_operand.vmem [shape: f32[9,96], index: 1, kind: input, shape index: {}]
  %s2 = inlined_call_operand.vmem [shape: f32[96,96], index: 2, kind: input, shape index: {}]
  %s3 = inlined_call_operand.vmem [shape: f32[128,32], index: 3, kind: input, shape index: {}]
  %s4 = inlined_call_operand.vmem [shape: f32[6,96], index: 4, kind: input, shape index: {}]
  %s5 = inlined_call_operand.vmem [shape: f32[128,32], index: 5, kind: output, shape index: {}]
  %s6 = sld [smem:[#allocation0]]
  $region30: #{_dof9_pallas.1} parent=0
    _
  %s8 = ssub.s32 1, %s6
  %s9 = scalar_select 0, %s8, %s6
  // Predicated region
  $region2: #{_dof9_pallas.1} parent=0 // pred_check
    _
  $region3: #{_dof9_pallas.1} parent=0 // pred_check_branch
    %11 = sbr.rel (0) target = $region5
  $region4: #{_dof9_pallas.1} parent=0 // pred_region
    _
  $region5: #{_dof9_pallas.1} parent=0 // pred_fallthru
    _
  // Predicated region
  $region6: #{_dof9_pallas.1} parent=0 // pred_check
    _
  $region7: #{_dof9_pallas.1} parent=0 // pred_check_branch
    %13 = sbr.rel (0) target = $region9
  $region8: #{_dof9_pallas.1} parent=0 // pred_region
    _
  $region9: #{_dof9_pallas.1} parent=0 // pred_fallthru
    _
  // Predicated region
  $region10: #{_dof9_pallas.1} parent=0 // pred_check
    _
  $region11: #{_dof9_pallas.1} parent=0 // pred_check_branch
    %15 = sbr.rel (0) target = $region13
  $region12: #{_dof9_pallas.1} parent=0 // pred_region
    _
  $region13: #{_dof9_pallas.1} parent=0 // pred_fallthru
    _
  // Predicated region
  $region14: #{_dof9_pallas.1} parent=0 // pred_check
    _
  $region15: #{_dof9_pallas.1} parent=0 // pred_check_branch
    %17 = sbr.rel (0) target = $region17
  $region16: #{_dof9_pallas.1} parent=0 // pred_region
    _
  $region17: #{_dof9_pallas.1} parent=0 // pred_fallthru
    _
  // Predicated region
  $region18: #{_dof9_pallas.1} parent=0 // pred_check
    _
  $region19: #{_dof9_pallas.1} parent=0 // pred_check_branch
    %19 = sbr.rel (0) target = $region21
  $region20: #{_dof9_pallas.1} parent=0 // pred_region
    _
  $region21: #{_dof9_pallas.1} parent=0 // pred_fallthru
    _
  %v20 = vlaneseq
  %v21 = vshrl.u32 %v20, 7
  %v22 = vadd.s32 %v21, 8
  %v23 = vadd.s32 %v21, 16
  %v24 = vadd.s32 %v21, 24
  %v25 = vadd.s32 %v21, 32
  %v26 = vadd.s32 %v21, 40
  %v27 = vadd.s32 %v21, 48
  %v28 = vadd.s32 %v21, 56
  %v29 = vadd.s32 %v21, 64
  %v30 = vadd.s32 %v21, 72
  %v31 = vadd.s32 %v21, 80
  %v32 = vadd.s32 %v21, 88
  %v33 = vlaneseq
  %v34 = vand.u32 %v33, 127
  %vm35 = vcmp.ge.s32.totalorder %v21, 32
  %vm36 = vcmp.ge.s32.totalorder %v22, 32
  %vm37 = vcmp.ge.s32.totalorder %v23, 32
  %vm38 = vcmp.ge.s32.totalorder %v24, 32
  %vm39 = vcmp.ge.s32.totalorder %v25, 32
  %vm40 = vcmp.ge.s32.totalorder %v26, 32
  %vm41 = vcmp.ge.s32.totalorder %v27, 32
  %vm42 = vcmp.ge.s32.totalorder %v28, 32
  %vm43 = vcmp.ge.s32.totalorder %v29, 32
  %vm44 = vcmp.ge.s32.totalorder %v30, 32
  %vm45 = vcmp.ge.s32.totalorder %v31, 32
  %vm46 = vcmp.ge.s32.totalorder %v32, 32
  %v47 = vsel %vm35, 1, 0
  %v48 = vsel %vm36, 1, 0
  %v49 = vsel %vm37, 1, 0
  %v50 = vsel %vm38, 1, 0
  %v51 = vsel %vm39, 1, 0
  %v52 = vsel %vm40, 1, 0
  %v53 = vsel %vm41, 1, 0
  %v54 = vsel %vm42, 1, 0
  %v55 = vsel %vm43, 1, 0
  %v56 = vsel %vm44, 1, 0
  %v57 = vsel %vm45, 1, 0
  %v58 = vsel %vm46, 1, 0
  %vm59 = vcmp.ge.s32.totalorder %v21, 64
  %vm60 = vcmp.ge.s32.totalorder %v22, 64
  %vm61 = vcmp.ge.s32.totalorder %v23, 64
  %vm62 = vcmp.ge.s32.totalorder %v24, 64
  %vm63 = vcmp.ge.s32.totalorder %v25, 64
  %vm64 = vcmp.ge.s32.totalorder %v26, 64
  %vm65 = vcmp.ge.s32.totalorder %v27, 64
  %vm66 = vcmp.ge.s32.totalorder %v28, 64
  %vm67 = vcmp.ge.s32.totalorder %v29, 64
  %vm68 = vcmp.ge.s32.totalorder %v30, 64
  %vm69 = vcmp.ge.s32.totalorder %v31, 64
  %vm70 = vcmp.ge.s32.totalorder %v32, 64
  %v71 = vsel %vm59, 1, 0
  %v72 = vsel %vm60, 1, 0
  %v73 = vsel %vm61, 1, 0
  %v74 = vsel %vm62, 1, 0
  %v75 = vsel %vm63, 1, 0
  %v76 = vsel %vm64, 1, 0
  %v77 = vsel %vm65, 1, 0
  %v78 = vsel %vm66, 1, 0
  %v79 = vsel %vm67, 1, 0
  %v80 = vsel %vm68, 1, 0
  %v81 = vsel %vm69, 1, 0
  %v82 = vsel %vm70, 1, 0
  %v83 = vadd.s32 %v47, %v71
  %v84 = vadd.s32 %v48, %v72
  %v85 = vadd.s32 %v49, %v73
  %v86 = vadd.s32 %v50, %v74
  %v87 = vadd.s32 %v51, %v75
  %v88 = vadd.s32 %v52, %v76
  %v89 = vadd.s32 %v53, %v77
  %v90 = vadd.s32 %v54, %v78
  %v91 = vadd.s32 %v55, %v79
  %v92 = vadd.s32 %v56, %v80
  %v93 = vadd.s32 %v57, %v81
  %v94 = vadd.s32 %v58, %v82
  %vm95 = vcmp.ge.s32.totalorder %v34, 32
  %v96 = vsel %vm95, 1, 0
  %vm97 = vcmp.ge.s32.totalorder %v34, 64
  %v98 = vsel %vm97, 1, 0
  %v99 = vadd.s32 %v96, %v98
  %vm100 = vcmp.eq.s32.totalorder %v83, %v99
  %vm101 = vcmp.eq.s32.totalorder %v84, %v99
  %vm102 = vcmp.eq.s32.totalorder %v85, %v99
  %vm103 = vcmp.eq.s32.totalorder %v86, %v99
  %vm104 = vcmp.eq.s32.totalorder %v87, %v99
  %vm105 = vcmp.eq.s32.totalorder %v88, %v99
  %vm106 = vcmp.eq.s32.totalorder %v89, %v99
  %vm107 = vcmp.eq.s32.totalorder %v90, %v99
  %vm108 = vcmp.eq.s32.totalorder %v91, %v99
  %vm109 = vcmp.eq.s32.totalorder %v92, %v99
  %vm110 = vcmp.eq.s32.totalorder %v93, %v99
  %vm111 = vcmp.eq.s32.totalorder %v94, %v99
  %v112 = vsel %vm100, 0.03125, 0.0
  %v113 = vsel %vm101, 0.03125, 0.0
  %v114 = vsel %vm102, 0.03125, 0.0
  %v115 = vsel %vm103, 0.03125, 0.0
  %v116 = vsel %vm104, 0.03125, 0.0
  %v117 = vsel %vm105, 0.03125, 0.0
  %v118 = vsel %vm106, 0.03125, 0.0
  %v119 = vsel %vm107, 0.03125, 0.0
  %v120 = vsel %vm108, 0.03125, 0.0
  %v121 = vsel %vm109, 0.03125, 0.0
  %v122 = vsel %vm110, 0.03125, 0.0
  %v123 = vsel %vm111, 0.03125, 0.0
  %v124 = vld [vmem:[%s0] sm:$0xff]
  %v125 = vld [vmem:[%s0 + $0x8] sm:$0xff]
  %v126 = vld [vmem:[%s0 + $0x10] sm:$0xff]
  %v127 = vld [vmem:[%s0 + $0x18] sm:$0xff]
  %v128 = vld [vmem:[%s0 + $0x20] sm:$0xff]
  %v129 = vld [vmem:[%s0 + $0x28] sm:$0xff]
  %v130 = vld [vmem:[%s0 + $0x30] sm:$0xff]
  %v131 = vld [vmem:[%s0 + $0x38] sm:$0xff]
  %v132 = vld [vmem:[%s0 + $0x40] sm:$0xff]
  %v133 = vld [vmem:[%s0 + $0x48] sm:$0xff]
  %v134 = vld [vmem:[%s0 + $0x50] sm:$0xff]
  %v135 = vld [vmem:[%s0 + $0x58] sm:$0xff]
  %v136 = vld [vmem:[%s0 + $0x60] sm:$0xff]
  %v137 = vld [vmem:[%s0 + $0x68] sm:$0xff]
  %v138 = vld [vmem:[%s0 + $0x70] sm:$0xff]
  %v139 = vld [vmem:[%s0 + $0x78] sm:$0xff]
  %v140 = vld [vmem:[%s1] sm:$0xff]
  %v141 = vld [vmem:[%s1 + $0x8] sm:$0x1]
  %v142 = vld [vmem:[%s4] sm:$0x1]
  %v143 = vlaneseq
  %v144 = vshrl.u32 %v143, 7
  %v145 = vsub.s32 0, %v144
  %v146 = vrot.slane %v142, %v145
  %vm147 = vcmask 72704
  %v149 = vsel %vm147, %v124, 0
  %v152 = vsel %vm147, %v125, 0
  %v155 = vsel %vm147, %v126, 0
  %v158 = vsel %vm147, %v127, 0
  %v161 = vsel %vm147, %v128, 0
  %v164 = vsel %vm147, %v129, 0
  %v167 = vsel %vm147, %v130, 0
  %v170 = vsel %vm147, %v131, 0
  %v173 = vsel %vm147, %v132, 0
  %v176 = vsel %vm147, %v133, 0
  %v179 = vsel %vm147, %v134, 0
  %v182 = vsel %vm147, %v135, 0
  %v185 = vsel %vm147, %v136, 0
  %v188 = vsel %vm147, %v137, 0
  %v191 = vsel %vm147, %v138, 0
  %v194 = vsel %vm147, %v139, 0
  %vm196 = vcmask 1040384
  %v198 = vsel %vm196, %v141, 0
  %200 = vmatprep.subr.mxu0 0.0
  %201 = vmatpush1.msra.mxu0 %v140
  %202 = vmatprep.subr.mxu0 0.0
  %203 = vmatpush1.msra.mxu0 %v198
  %204 = vmatprep.subr.mxu0 0.0
  %205 = vmatpush1.msra.mxu0 0.0
  %206 = vmatprep.subr.mxu0 0.0
  %207 = vmatpush1.msra.mxu0 0.0
  %208 = vmatprep.subr.mxu0 0.0
  %209 = vmatpush1.msra.mxu0 0.0
  %210 = vmatprep.subr.mxu0 0.0
  %211 = vmatpush1.msra.mxu0 0.0
  %212 = vmatprep.subr.mxu0 0.0
  %213 = vmatpush1.msra.mxu0 0.0
  %214 = vmatprep.subr.mxu0 0.0
  %215 = vmatpush1.msra.mxu0 0.0
  %216 = vmatprep.subr.mxu0 0.0
  %217 = vmatpush1.msra.mxu0 0.0
  %218 = vmatprep.subr.mxu0 0.0
  %219 = vmatpush1.msra.mxu0 0.0
  %220 = vmatprep.subr.mxu0 0.0
  %221 = vmatpush1.msra.mxu0 0.0
  %222 = vmatprep.subr.mxu0 0.0
  %223 = vmatpush1.msra.mxu0 0.0
  %224 = vmatprep.subr.mxu0 0.0
  %225 = vmatpush1.msra.mxu0 0.0
  %226 = vmatprep.subr.mxu0 0.0
  %227 = vmatpush1.msra.mxu0 0.0
  %228 = vmatprep.subr.mxu0 0.0
  %229 = vmatpush1.msra.mxu0 0.0
  %230 = vmatprep.subr.mxu0 0.0
  %231 = vmatpush1.msra.mxu0 0.0
  %232 = vmatprep.subr.mxu0 0.0
  %233 = vmatpush1.msra.mxu0 0.0
  %234 = vmatprep.subr.mxu0 0.0
  %235 = vmatpush1.msra.mxu0 0.0
  %236 = vmatprep.subr.mxu0 0.0
  %237 = vmatpush1.msra.mxu0 0.0
  %238 = vmatprep.subr.mxu0 0.0
  %239 = vmatpush1.msra.mxu0 0.0
  %240 = vmatprep.subr.mxu0 0.0
  %241 = vmatpush1.msra.mxu0 0.0
  %242 = vmatprep.subr.mxu0 0.0
  %243 = vmatpush1.msra.mxu0 0.0
  %244 = vmatprep.subr.mxu0 0.0
  %245 = vmatpush1.msra.mxu0 0.0
  %246 = vmatprep.subr.mxu0 0.0
  %247 = vmatpush1.msra.mxu0 0.0
  %248 = vmatprep.subr.mxu0 0.0
  %249 = vmatpush1.msra.mxu0 0.0
  %250 = vmatprep.subr.mxu0 0.0
  %251 = vmatpush1.msra.mxu0 0.0
  %252 = vmatprep.subr.mxu0 0.0
  %253 = vmatpush1.msra.mxu0 0.0
  %254 = vmatprep.subr.mxu0 0.0
  %255 = vmatpush1.msra.mxu0 0.0
  %256 = vmatprep.subr.mxu0 0.0
  %257 = vmatpush1.msra.mxu0 0.0
  %258 = vmatprep.subr.mxu0 0.0
  %259 = vmatpush1.msra.mxu0 0.0
  %260 = vmatprep.subr.mxu0 0.0
  %261 = vmatpush1.msra.mxu0 0.0
  %262 = vmatprep.subr.mxu0 0.0
  %263 = vmatpush1.msra.mxu0 0.0
  %264 = vmatprep.mubr.f32.mxu0 0.0
  %265 = vmatmul.mubr.f32.gmra.mrb[0].mxu0 %v149
  %v266 = vpop.f32.mrb[0].mxu0
  %v267 = vadd.f32 %v146, %v266
  %v268 = vpop.f32.mrb[0].mxu0
  %269 = vmatprep.mubr.f32.mxu0 0.0
  %270 = vmatmul.mubr.f32.gmra.mrb[0].mxu0 %v152
  %v271 = vpop.f32.mrb[0].mxu0
  %v272 = vadd.f32 %v146, %v271
  %v273 = vpop.f32.mrb[0].mxu0
  %274 = vmatprep.mubr.f32.mxu0 0.0
  %275 = vmatmul.mubr.f32.gmra.mrb[0].mxu0 %v155
  %v276 = vpop.f32.mrb[0].mxu0
  %v277 = vadd.f32 %v146, %v276
  %v278 = vpop.f32.mrb[0].mxu0
  %279 = vmatprep.mubr.f32.mxu0 0.0
  %280 = vmatmul.mubr.f32.gmra.mrb[0].mxu0 %v158
  %v281 = vpop.f32.mrb[0].mxu0
  %v282 = vadd.f32 %v146, %v281
  %v283 = vpop.f32.mrb[0].mxu0
  %284 = vmatprep.mubr.f32.mxu0 0.0
  %285 = vmatmul.mubr.f32.gmra.mrb[0].mxu0 %v161
  %v286 = vpop.f32.mrb[0].mxu0
  %v287 = vadd.f32 %v146, %v286
  %v288 = vpop.f32.mrb[0].mxu0
  %289 = vmatprep.mubr.f32.mxu0 0.0
  %290 = vmatmul.mubr.f32.gmra.mrb[0].mxu0 %v164
  %v291 = vpop.f32.mrb[0].mxu0
  %v292 = vadd.f32 %v146, %v291
  %v293 = vpop.f32.mrb[0].mxu0
  %294 = vmatprep.mubr.f32.mxu0 0.0
  %295 = vmatmul.mubr.f32.gmra.mrb[0].mxu0 %v167
  %v296 = vpop.f32.mrb[0].mxu0
  %v297 = vadd.f32 %v146, %v296
  %v298 = vpop.f32.mrb[0].mxu0
  %299 = vmatprep.mubr.f32.mxu0 0.0
  %300 = vmatmul.mubr.f32.gmra.mrb[0].mxu0 %v170
  %v301 = vpop.f32.mrb[0].mxu0
  %v302 = vadd.f32 %v146, %v301
  %v303 = vpop.f32.mrb[0].mxu0
  %304 = vmatprep.mubr.f32.mxu0 0.0
  %305 = vmatmul.mubr.f32.gmra.mrb[0].mxu0 %v173
  %v306 = vpop.f32.mrb[0].mxu0
  %v307 = vadd.f32 %v146, %v306
  %v308 = vpop.f32.mrb[0].mxu0
  %309 = vmatprep.mubr.f32.mxu0 0.0
  %310 = vmatmul.mubr.f32.gmra.mrb[0].mxu0 %v176
  %v311 = vpop.f32.mrb[0].mxu0
  %v312 = vadd.f32 %v146, %v311
  %v313 = vpop.f32.mrb[0].mxu0
  %314 = vmatprep.mubr.f32.mxu0 0.0
  %315 = vmatmul.mubr.f32.gmra.mrb[0].mxu0 %v179
  %v316 = vpop.f32.mrb[0].mxu0
  %v317 = vadd.f32 %v146, %v316
  %v318 = vpop.f32.mrb[0].mxu0
  %319 = vmatprep.mubr.f32.mxu0 0.0
  %320 = vmatmul.mubr.f32.gmra.mrb[0].mxu0 %v182
  %v321 = vpop.f32.mrb[0].mxu0
  %v322 = vadd.f32 %v146, %v321
  %v323 = vpop.f32.mrb[0].mxu0
  %324 = vmatprep.mubr.f32.mxu0 0.0
  %325 = vmatmul.mubr.f32.gmra.mrb[0].mxu0 %v185
  %v326 = vpop.f32.mrb[0].mxu0
  %v327 = vadd.f32 %v146, %v326
  %v328 = vpop.f32.mrb[0].mxu0
  %329 = vmatprep.mubr.f32.mxu0 0.0
  %330 = vmatmul.mubr.f32.gmra.mrb[0].mxu0 %v188
  %v331 = vpop.f32.mrb[0].mxu0
  %v332 = vadd.f32 %v146, %v331
  %v333 = vpop.f32.mrb[0].mxu0
  %334 = vmatprep.mubr.f32.mxu0 0.0
  %335 = vmatmul.mubr.f32.gmra.mrb[0].mxu0 %v191
  %v336 = vpop.f32.mrb[0].mxu0
  %v337 = vadd.f32 %v146, %v336
  %v338 = vpop.f32.mrb[0].mxu0
  %339 = vmatprep.mubr.f32.mxu0 0.0
  %340 = vmatmul.mubr.f32.gmra.mrb[0].mxu0 %v194
  %v341 = vpop.f32.mrb[0].mxu0
  %v342 = vadd.f32 %v146, %v341
  %v343 = vpop.f32.mrb[0].mxu0
  %344 = vdwg.mxu0
  %v345 = vmax.f32 %v267, 0.0
  %v346 = vmax.f32 %v272, 0.0
  %v347 = vmax.f32 %v277, 0.0
  %v348 = vmax.f32 %v282, 0.0
  %v349 = vmax.f32 %v287, 0.0
  %v350 = vmax.f32 %v292, 0.0
  %v351 = vmax.f32 %v297, 0.0
  %v352 = vmax.f32 %v302, 0.0
  %v353 = vmax.f32 %v307, 0.0
  %v354 = vmax.f32 %v312, 0.0
  %v355 = vmax.f32 %v317, 0.0
  %v356 = vmax.f32 %v322, 0.0
  %v357 = vmax.f32 %v327, 0.0
  %v358 = vmax.f32 %v332, 0.0
  %v359 = vmax.f32 %v337, 0.0
  %v360 = vmax.f32 %v342, 0.0
  %vm361 = vcmask 785408
  %v363 = vsel %vm361, %v345, 0
  %v366 = vsel %vm361, %v346, 0
  %v369 = vsel %vm361, %v347, 0
  %v372 = vsel %vm361, %v348, 0
  %v375 = vsel %vm361, %v349, 0
  %v378 = vsel %vm361, %v350, 0
  %v381 = vsel %vm361, %v351, 0
  %v384 = vsel %vm361, %v352, 0
  %v387 = vsel %vm361, %v353, 0
  %v390 = vsel %vm361, %v354, 0
  %v393 = vsel %vm361, %v355, 0
  %v396 = vsel %vm361, %v356, 0
  %v399 = vsel %vm361, %v357, 0
  %v402 = vsel %vm361, %v358, 0
  %v405 = vsel %vm361, %v359, 0
  %v408 = vsel %vm361, %v360, 0
  %410 = vmatprep.subr.mxu0 0.0
  %411 = vmatpush1.msra.mxu0 %v112
  %412 = vmatprep.subr.mxu0 0.0
  %413 = vmatpush1.msra.mxu0 %v113
  %414 = vmatprep.subr.mxu0 0.0
  %415 = vmatpush1.msra.mxu0 %v114
  %416 = vmatprep.subr.mxu0 0.0
  %417 = vmatpush1.msra.mxu0 %v115
  %418 = vmatprep.subr.mxu0 0.0
  %419 = vmatpush1.msra.mxu0 %v116
  %420 = vmatprep.subr.mxu0 0.0
  %421 = vmatpush1.msra.mxu0 %v117
  %422 = vmatprep.subr.mxu0 0.0
  %423 = vmatpush1.msra.mxu0 %v118
  %424 = vmatprep.subr.mxu0 0.0
  %425 = vmatpush1.msra.mxu0 %v119
  %426 = vmatprep.subr.mxu0 0.0
  %427 = vmatpush1.msra.mxu0 %v120
  %428 = vmatprep.subr.mxu0 0.0
  %429 = vmatpush1.msra.mxu0 %v121
  %430 = vmatprep.subr.mxu0 0.0
  %431 = vmatpush1.msra.mxu0 %v122
  %432 = vmatprep.subr.mxu0 0.0
  %433 = vmatpush1.msra.mxu0 %v123
  %434 = vmatprep.subr.mxu0 0.0
  %435 = vmatpush1.msra.mxu0 0.0
  %436 = vmatprep.subr.mxu0 0.0
  %437 = vmatpush1.msra.mxu0 0.0
  %438 = vmatprep.subr.mxu0 0.0
  %439 = vmatpush1.msra.mxu0 0.0
  %440 = vmatprep.subr.mxu0 0.0
  %441 = vmatpush1.msra.mxu0 0.0
  %442 = vmatprep.subr.mxu0 0.0
  %443 = vmatpush1.msra.mxu0 0.0
  %444 = vmatprep.subr.mxu0 0.0
  %445 = vmatpush1.msra.mxu0 0.0
  %446 = vmatprep.subr.mxu0 0.0
  %447 = vmatpush1.msra.mxu0 0.0
  %448 = vmatprep.subr.mxu0 0.0
  %449 = vmatpush1.msra.mxu0 0.0
  %450 = vmatprep.subr.mxu0 0.0
  %451 = vmatpush1.msra.mxu0 0.0
  %452 = vmatprep.subr.mxu0 0.0
  %453 = vmatpush1.msra.mxu0 0.0
  %454 = vmatprep.subr.mxu0 0.0
  %455 = vmatpush1.msra.mxu0 0.0
  %456 = vmatprep.subr.mxu0 0.0
  %457 = vmatpush1.msra.mxu0 0.0
  %458 = vmatprep.subr.mxu0 0.0
  %459 = vmatpush1.msra.mxu0 0.0
  %460 = vmatprep.subr.mxu0 0.0
  %461 = vmatpush1.msra.mxu0 0.0
  %462 = vmatprep.subr.mxu0 0.0
  %463 = vmatpush1.msra.mxu0 0.0
  %464 = vmatprep.subr.mxu0 0.0
  %465 = vmatpush1.msra.mxu0 0.0
  %466 = vmatprep.subr.mxu0 0.0
  %467 = vmatpush1.msra.mxu0 0.0
  %468 = vmatprep.subr.mxu0 0.0
  %469 = vmatpush1.msra.mxu0 0.0
  %470 = vmatprep.subr.mxu0 0.0
  %471 = vmatpush1.msra.mxu0 0.0
  %472 = vmatprep.subr.mxu0 0.0
  %473 = vmatpush1.msra.mxu0 0.0
  %474 = vmatprep.mubr.f32.mxu0 0.0
  %475 = vmatmul.mubr.f32.gmra.mrb[0].mxu0 %v363
  %v476 = vpop.f32.mrb[0].mxu0
  %v477 = vadd.f32 0.0, %v476
  %v478 = vpop.f32.mrb[0].mxu0
  %479 = vmatprep.mubr.f32.mxu0 0.0
  %480 = vmatmul.mubr.f32.gmra.mrb[0].mxu0 %v366
  %v481 = vpop.f32.mrb[0].mxu0
  %v482 = vadd.f32 0.0, %v481
  %v483 = vpop.f32.mrb[0].mxu0
  %484 = vmatprep.mubr.f32.mxu0 0.0
  %485 = vmatmul.mubr.f32.gmra.mrb[0].mxu0 %v369
  %v486 = vpop.f32.mrb[0].mxu0
  %v487 = vadd.f32 0.0, %v486
  %v488 = vpop.f32.mrb[0].mxu0
  %489 = vmatprep.mubr.f32.mxu0 0.0
  %490 = vmatmul.mubr.f32.gmra.mrb[0].mxu0 %v372
  %v491 = vpop.f32.mrb[0].mxu0
  %v492 = vadd.f32 0.0, %v491
  %v493 = vpop.f32.mrb[0].mxu0
  %494 = vmatprep.mubr.f32.mxu0 0.0
  %495 = vmatmul.mubr.f32.gmra.mrb[0].mxu0 %v375
  %v496 = vpop.f32.mrb[0].mxu0
  %v497 = vadd.f32 0.0, %v496
  %v498 = vpop.f32.mrb[0].mxu0
  %499 = vmatprep.mubr.f32.mxu0 0.0
  %500 = vmatmul.mubr.f32.gmra.mrb[0].mxu0 %v378
  %v501 = vpop.f32.mrb[0].mxu0
  %v502 = vadd.f32 0.0, %v501
  %v503 = vpop.f32.mrb[0].mxu0
  %504 = vmatprep.mubr.f32.mxu0 0.0
  %505 = vmatmul.mubr.f32.gmra.mrb[0].mxu0 %v381
  %v506 = vpop.f32.mrb[0].mxu0
  %v507 = vadd.f32 0.0, %v506
  %v508 = vpop.f32.mrb[0].mxu0
  %509 = vmatprep.mubr.f32.mxu0 0.0
  %510 = vmatmul.mubr.f32.gmra.mrb[0].mxu0 %v384
  %v511 = vpop.f32.mrb[0].mxu0
  %v512 = vadd.f32 0.0, %v511
  %v513 = vpop.f32.mrb[0].mxu0
  %514 = vmatprep.mubr.f32.mxu0 0.0
  %515 = vmatmul.mubr.f32.gmra.mrb[0].mxu0 %v387
  %v516 = vpop.f32.mrb[0].mxu0
  %v517 = vadd.f32 0.0, %v516
  %v518 = vpop.f32.mrb[0].mxu0
  %519 = vmatprep.mubr.f32.mxu0 0.0
  %520 = vmatmul.mubr.f32.gmra.mrb[0].mxu0 %v390
  %v521 = vpop.f32.mrb[0].mxu0
  %v522 = vadd.f32 0.0, %v521
  %v523 = vpop.f32.mrb[0].mxu0
  %524 = vmatprep.mubr.f32.mxu0 0.0
  %525 = vmatmul.mubr.f32.gmra.mrb[0].mxu0 %v393
  %v526 = vpop.f32.mrb[0].mxu0
  %v527 = vadd.f32 0.0, %v526
  %v528 = vpop.f32.mrb[0].mxu0
  %529 = vmatprep.mubr.f32.mxu0 0.0
  %530 = vmatmul.mubr.f32.gmra.mrb[0].mxu0 %v396
  %v531 = vpop.f32.mrb[0].mxu0
  %v532 = vadd.f32 0.0, %v531
  %v533 = vpop.f32.mrb[0].mxu0
  %534 = vmatprep.mubr.f32.mxu0 0.0
  %535 = vmatmul.mubr.f32.gmra.mrb[0].mxu0 %v399
  %v536 = vpop.f32.mrb[0].mxu0
  %v537 = vadd.f32 0.0, %v536
  %v538 = vpop.f32.mrb[0].mxu0
  %539 = vmatprep.mubr.f32.mxu0 0.0
  %540 = vmatmul.mubr.f32.gmra.mrb[0].mxu0 %v402
  %v541 = vpop.f32.mrb[0].mxu0
  %v542 = vadd.f32 0.0, %v541
  %v543 = vpop.f32.mrb[0].mxu0
  %544 = vmatprep.mubr.f32.mxu0 0.0
  %545 = vmatmul.mubr.f32.gmra.mrb[0].mxu0 %v405
  %v546 = vpop.f32.mrb[0].mxu0
  %v547 = vadd.f32 0.0, %v546
  %v548 = vpop.f32.mrb[0].mxu0
  %549 = vmatprep.mubr.f32.mxu0 0.0
  %550 = vmatmul.mubr.f32.gmra.mrb[0].mxu0 %v408
  %v551 = vpop.f32.mrb[0].mxu0
  %v552 = vadd.f32 0.0, %v551
  %v553 = vpop.f32.mrb[0].mxu0
  %554 = vdwg.mxu0
  %v555 = vsub.f32 %v345, %v477
  %v556 = vsub.f32 %v346, %v482
  %v557 = vsub.f32 %v347, %v487
  %v558 = vsub.f32 %v348, %v492
  %v559 = vsub.f32 %v349, %v497
  %v560 = vsub.f32 %v350, %v502
  %v561 = vsub.f32 %v351, %v507
  %v562 = vsub.f32 %v352, %v512
  %v563 = vsub.f32 %v353, %v517
  %v564 = vsub.f32 %v354, %v522
  %v565 = vsub.f32 %v355, %v527
  %v566 = vsub.f32 %v356, %v532
  %v567 = vsub.f32 %v357, %v537
  %v568 = vsub.f32 %v358, %v542
  %v569 = vsub.f32 %v359, %v547
  %v570 = vsub.f32 %v360, %v552
  %v571 = vmul.f32 %v555, %v555
  %v572 = vmul.f32 %v556, %v556
  %v573 = vmul.f32 %v557, %v557
  %v574 = vmul.f32 %v558, %v558
  %v575 = vmul.f32 %v559, %v559
  %v576 = vmul.f32 %v560, %v560
  %v577 = vmul.f32 %v561, %v561
  %v578 = vmul.f32 %v562, %v562
  %v579 = vmul.f32 %v563, %v563
  %v580 = vmul.f32 %v564, %v564
  %v581 = vmul.f32 %v565, %v565
  %v582 = vmul.f32 %v566, %v566
  %v583 = vmul.f32 %v567, %v567
  %v584 = vmul.f32 %v568, %v568
  %v585 = vmul.f32 %v569, %v569
  %v586 = vmul.f32 %v570, %v570
  %v588 = vsel %vm361, %v571, 0
  %v591 = vsel %vm361, %v572, 0
  %v594 = vsel %vm361, %v573, 0
  %v597 = vsel %vm361, %v574, 0
  %v600 = vsel %vm361, %v575, 0
  %v603 = vsel %vm361, %v576, 0
  %v606 = vsel %vm361, %v577, 0
  %v609 = vsel %vm361, %v578, 0
  %v612 = vsel %vm361, %v579, 0
  %v615 = vsel %vm361, %v580, 0
  %v618 = vsel %vm361, %v581, 0
  %v621 = vsel %vm361, %v582, 0
  %v624 = vsel %vm361, %v583, 0
  %v627 = vsel %vm361, %v584, 0
  %v630 = vsel %vm361, %v585, 0
  %v633 = vsel %vm361, %v586, 0
  %635 = vmatprep.subr.mxu0 0.0
  %636 = vmatpush1.msra.mxu0 %v112
  %637 = vmatprep.subr.mxu0 0.0
  %638 = vmatpush1.msra.mxu0 %v113
  %639 = vmatprep.subr.mxu0 0.0
  %640 = vmatpush1.msra.mxu0 %v114
  %641 = vmatprep.subr.mxu0 0.0
  %642 = vmatpush1.msra.mxu0 %v115
  %643 = vmatprep.subr.mxu0 0.0
  %644 = vmatpush1.msra.mxu0 %v116
  %645 = vmatprep.subr.mxu0 0.0
  %646 = vmatpush1.msra.mxu0 %v117
  %647 = vmatprep.subr.mxu0 0.0
  %648 = vmatpush1.msra.mxu0 %v118
  %649 = vmatprep.subr.mxu0 0.0
  %650 = vmatpush1.msra.mxu0 %v119
  %651 = vmatprep.subr.mxu0 0.0
  %652 = vmatpush1.msra.mxu0 %v120
  %653 = vmatprep.subr.mxu0 0.0
  %654 = vmatpush1.msra.mxu0 %v121
  %655 = vmatprep.subr.mxu0 0.0
  %656 = vmatpush1.msra.mxu0 %v122
  %657 = vmatprep.subr.mxu0 0.0
  %658 = vmatpush1.msra.mxu0 %v123
  %659 = vmatprep.subr.mxu0 0.0
  %660 = vmatpush1.msra.mxu0 0.0
  %661 = vmatprep.subr.mxu0 0.0
  %662 = vmatpush1.msra.mxu0 0.0
  %663 = vmatprep.subr.mxu0 0.0
  %664 = vmatpush1.msra.mxu0 0.0
  %665 = vmatprep.subr.mxu0 0.0
  %666 = vmatpush1.msra.mxu0 0.0
  %667 = vmatprep.subr.mxu0 0.0
  %668 = vmatpush1.msra.mxu0 0.0
  %669 = vmatprep.subr.mxu0 0.0
  %670 = vmatpush1.msra.mxu0 0.0
  %671 = vmatprep.subr.mxu0 0.0
  %672 = vmatpush1.msra.mxu0 0.0
  %673 = vmatprep.subr.mxu0 0.0
  %674 = vmatpush1.msra.mxu0 0.0
  %675 = vmatprep.subr.mxu0 0.0
  %676 = vmatpush1.msra.mxu0 0.0
  %677 = vmatprep.subr.mxu0 0.0
  %678 = vmatpush1.msra.mxu0 0.0
  %679 = vmatprep.subr.mxu0 0.0
  %680 = vmatpush1.msra.mxu0 0.0
  %681 = vmatprep.subr.mxu0 0.0
  %682 = vmatpush1.msra.mxu0 0.0
  %683 = vmatprep.subr.mxu0 0.0
  %684 = vmatpush1.msra.mxu0 0.0
  %685 = vmatprep.subr.mxu0 0.0
  %686 = vmatpush1.msra.mxu0 0.0
  %687 = vmatprep.subr.mxu0 0.0
  %688 = vmatpush1.msra.mxu0 0.0
  %689 = vmatprep.subr.mxu0 0.0
  %690 = vmatpush1.msra.mxu0 0.0
  %691 = vmatprep.subr.mxu0 0.0
  %692 = vmatpush1.msra.mxu0 0.0
  %693 = vmatprep.subr.mxu0 0.0
  %694 = vmatpush1.msra.mxu0 0.0
  %695 = vmatprep.subr.mxu0 0.0
  %696 = vmatpush1.msra.mxu0 0.0
  %697 = vmatprep.subr.mxu0 0.0
  %698 = vmatpush1.msra.mxu0 0.0
  %699 = vmatprep.mubr.f32.mxu0 0.0
  %700 = vmatmul.mubr.f32.gmra.mrb[0].mxu0 %v588
  %v701 = vpop.f32.mrb[0].mxu0
  %v702 = vadd.f32 1e-05, %v701
  %v703 = vpop.f32.mrb[0].mxu0
  %704 = vmatprep.mubr.f32.mxu0 0.0
  %705 = vmatmul.mubr.f32.gmra.mrb[0].mxu0 %v591
  %v706 = vpop.f32.mrb[0].mxu0
  %v707 = vadd.f32 1e-05, %v706
  %v708 = vpop.f32.mrb[0].mxu0
  %709 = vmatprep.mubr.f32.mxu0 0.0
  %710 = vmatmul.mubr.f32.gmra.mrb[0].mxu0 %v594
  %v711 = vpop.f32.mrb[0].mxu0
  %v712 = vadd.f32 1e-05, %v711
  %v713 = vpop.f32.mrb[0].mxu0
  %714 = vmatprep.mubr.f32.mxu0 0.0
  %715 = vmatmul.mubr.f32.gmra.mrb[0].mxu0 %v597
  %v716 = vpop.f32.mrb[0].mxu0
  %v717 = vadd.f32 1e-05, %v716
  %v718 = vpop.f32.mrb[0].mxu0
  %719 = vmatprep.mubr.f32.mxu0 0.0
  %720 = vmatmul.mubr.f32.gmra.mrb[0].mxu0 %v600
  %v721 = vpop.f32.mrb[0].mxu0
  %v722 = vadd.f32 1e-05, %v721
  %v723 = vpop.f32.mrb[0].mxu0
  %724 = vmatprep.mubr.f32.mxu0 0.0
  %725 = vmatmul.mubr.f32.gmra.mrb[0].mxu0 %v603
  %v726 = vpop.f32.mrb[0].mxu0
  %v727 = vadd.f32 1e-05, %v726
  %v728 = vpop.f32.mrb[0].mxu0
  %729 = vmatprep.mubr.f32.mxu0 0.0
  %730 = vmatmul.mubr.f32.gmra.mrb[0].mxu0 %v606
  %v731 = vpop.f32.mrb[0].mxu0
  %v732 = vadd.f32 1e-05, %v731
  %v733 = vpop.f32.mrb[0].mxu0
  %734 = vmatprep.mubr.f32.mxu0 0.0
  %735 = vmatmul.mubr.f32.gmra.mrb[0].mxu0 %v609
  %v736 = vpop.f32.mrb[0].mxu0
  %v737 = vadd.f32 1e-05, %v736
  %v738 = vpop.f32.mrb[0].mxu0
  %739 = vmatprep.mubr.f32.mxu0 0.0
  %740 = vmatmul.mubr.f32.gmra.mrb[0].mxu0 %v612
  %v741 = vpop.f32.mrb[0].mxu0
  %v742 = vadd.f32 1e-05, %v741
  %v743 = vpop.f32.mrb[0].mxu0
  %744 = vmatprep.mubr.f32.mxu0 0.0
  %745 = vmatmul.mubr.f32.gmra.mrb[0].mxu0 %v615
  %v746 = vpop.f32.mrb[0].mxu0
  %v747 = vadd.f32 1e-05, %v746
  %v748 = vpop.f32.mrb[0].mxu0
  %749 = vmatprep.mubr.f32.mxu0 0.0
  %750 = vmatmul.mubr.f32.gmra.mrb[0].mxu0 %v618
  %v751 = vpop.f32.mrb[0].mxu0
  %v752 = vadd.f32 1e-05, %v751
  %v753 = vpop.f32.mrb[0].mxu0
  %754 = vmatprep.mubr.f32.mxu0 0.0
  %755 = vmatmul.mubr.f32.gmra.mrb[0].mxu0 %v621
  %v756 = vpop.f32.mrb[0].mxu0
  %v757 = vadd.f32 1e-05, %v756
  %v758 = vpop.f32.mrb[0].mxu0
  %759 = vmatprep.mubr.f32.mxu0 0.0
  %760 = vmatmul.mubr.f32.gmra.mrb[0].mxu0 %v624
  %v761 = vpop.f32.mrb[0].mxu0
  %v762 = vadd.f32 1e-05, %v761
  %v763 = vpop.f32.mrb[0].mxu0
  %764 = vmatprep.mubr.f32.mxu0 0.0
  %765 = vmatmul.mubr.f32.gmra.mrb[0].mxu0 %v627
  %v766 = vpop.f32.mrb[0].mxu0
  %v767 = vadd.f32 1e-05, %v766
  %v768 = vpop.f32.mrb[0].mxu0
  %769 = vmatprep.mubr.f32.mxu0 0.0
  %770 = vmatmul.mubr.f32.gmra.mrb[0].mxu0 %v630
  %v771 = vpop.f32.mrb[0].mxu0
  %v772 = vadd.f32 1e-05, %v771
  %v773 = vpop.f32.mrb[0].mxu0
  %774 = vmatprep.mubr.f32.mxu0 0.0
  %775 = vmatmul.mubr.f32.gmra.mrb[0].mxu0 %v633
  %v776 = vpop.f32.mrb[0].mxu0
  %v777 = vadd.f32 1e-05, %v776
  %v778 = vpop.f32.mrb[0].mxu0
  %779 = vdwg.mxu0
  %v780 = vrsqrt.pop %v702
  %v781 = vrsqrt.pop %v707
  %v782 = vrsqrt.pop %v712
  %v783 = vrsqrt.pop %v717
  %v784 = vrsqrt.pop %v722
  %v785 = vrsqrt.pop %v727
  %v786 = vrsqrt.pop %v732
  %v787 = vrsqrt.pop %v737
  %v788 = vrsqrt.pop %v742
  %v789 = vrsqrt.pop %v747
  %v790 = vrsqrt.pop %v752
  %v791 = vrsqrt.pop %v757
  %v792 = vrsqrt.pop %v762
  %v793 = vrsqrt.pop %v767
  %v794 = vrsqrt.pop %v772
  %v795 = vrsqrt.pop %v777
  %v796 = vmul.f32 %v555, %v780
  %v797 = vmul.f32 %v556, %v781
  %v798 = vmul.f32 %v557, %v782
  %v799 = vmul.f32 %v558, %v783
  %v800 = vmul.f32 %v559, %v784
  %v801 = vmul.f32 %v560, %v785
  %v802 = vmul.f32 %v561, %v786
  %v803 = vmul.f32 %v562, %v787
  %v804 = vmul.f32 %v563, %v788
  %v805 = vmul.f32 %v564, %v789
  %v806 = vmul.f32 %v565, %v790
  %v807 = vmul.f32 %v566, %v791
  %v808 = vmul.f32 %v567, %v792
  %v809 = vmul.f32 %v568, %v793
  %v810 = vmul.f32 %v569, %v794
  %v811 = vmul.f32 %v570, %v795
  %v812 = vld [vmem:[%s2] sm:$0xff]
  %v813 = vld [vmem:[%s2 + $0x8] sm:$0xff]
  %v814 = vld [vmem:[%s2 + $0x10] sm:$0xff]
  %v815 = vld [vmem:[%s2 + $0x18] sm:$0xff]
  %v816 = vld [vmem:[%s2 + $0x20] sm:$0xff]
  %v817 = vld [vmem:[%s2 + $0x28] sm:$0xff]
  %v818 = vld [vmem:[%s2 + $0x30] sm:$0xff]
  %v819 = vld [vmem:[%s2 + $0x38] sm:$0xff]
  %v820 = vld [vmem:[%s2 + $0x40] sm:$0xff]
  %v821 = vld [vmem:[%s2 + $0x48] sm:$0xff]
  %v822 = vld [vmem:[%s2 + $0x50] sm:$0xff]
  %v823 = vld [vmem:[%s2 + $0x58] sm:$0xff]
  %v824 = vld [vmem:[%s4 + $0x1] sm:$0x1]
  %v825 = vlaneseq
  %v826 = vshrl.u32 %v825, 7
  %v827 = vsub.s32 0, %v826
  %v828 = vrot.slane %v824, %v827
  %v830 = vsel %vm361, %v796, 0
  %v833 = vsel %vm361, %v797, 0
  %v836 = vsel %vm361, %v798, 0
  %v839 = vsel %vm361, %v799, 0
  %v842 = vsel %vm361, %v800, 0
  %v845 = vsel %vm361, %v801, 0
  %v848 = vsel %vm361, %v802, 0
  %v851 = vsel %vm361, %v803, 0
  %v854 = vsel %vm361, %v804, 0
  %v857 = vsel %vm361, %v805, 0
  %v860 = vsel %vm361, %v806, 0
  %v863 = vsel %vm361, %v807, 0
  %v866 = vsel %vm361, %v808, 0
  %v869 = vsel %vm361, %v809, 0
  %v872 = vsel %vm361, %v810, 0
  %v875 = vsel %vm361, %v811, 0
  %877 = vmatprep.subr.mxu0 0.0
  %878 = vmatpush1.msra.mxu0 %v812
  %879 = vmatprep.subr.mxu0 0.0
  %880 = vmatpush1.msra.mxu0 %v813
  %881 = vmatprep.subr.mxu0 0.0
  %882 = vmatpush1.msra.mxu0 %v814
  %883 = vmatprep.subr.mxu0 0.0
  %884 = vmatpush1.msra.mxu0 %v815
  %885 = vmatprep.subr.mxu0 0.0
  %886 = vmatpush1.msra.mxu0 %v816
  %887 = vmatprep.subr.mxu0 0.0
  %888 = vmatpush1.msra.mxu0 %v817
  %889 = vmatprep.subr.mxu0 0.0
  %890 = vmatpush1.msra.mxu0 %v818
  %891 = vmatprep.subr.mxu0 0.0
  %892 = vmatpush1.msra.mxu0 %v819
  %893 = vmatprep.subr.mxu0 0.0
  %894 = vmatpush1.msra.mxu0 %v820
  %895 = vmatprep.subr.mxu0 0.0
  %896 = vmatpush1.msra.mxu0 %v821
  %897 = vmatprep.subr.mxu0 0.0
  %898 = vmatpush1.msra.mxu0 %v822
  %899 = vmatprep.subr.mxu0 0.0
  %900 = vmatpush1.msra.mxu0 %v823
  %901 = vmatprep.subr.mxu0 0.0
  %902 = vmatpush1.msra.mxu0 0.0
  %903 = vmatprep.subr.mxu0 0.0
  %904 = vmatpush1.msra.mxu0 0.0
  %905 = vmatprep.subr.mxu0 0.0
  %906 = vmatpush1.msra.mxu0 0.0
  %907 = vmatprep.subr.mxu0 0.0
  %908 = vmatpush1.msra.mxu0 0.0
  %909 = vmatprep.subr.mxu0 0.0
  %910 = vmatpush1.msra.mxu0 0.0
  %911 = vmatprep.subr.mxu0 0.0
  %912 = vmatpush1.msra.mxu0 0.0
  %913 = vmatprep.subr.mxu0 0.0
  %914 = vmatpush1.msra.mxu0 0.0
  %915 = vmatprep.subr.mxu0 0.0
  %916 = vmatpush1.msra.mxu0 0.0
  %917 = vmatprep.subr.mxu0 0.0
  %918 = vmatpush1.msra.mxu0 0.0
  %919 = vmatprep.subr.mxu0 0.0
  %920 = vmatpush1.msra.mxu0 0.0
  %921 = vmatprep.subr.mxu0 0.0
  %922 = vmatpush1.msra.mxu0 0.0
  %923 = vmatprep.subr.mxu0 0.0
  %924 = vmatpush1.msra.mxu0 0.0
  %925 = vmatprep.subr.mxu0 0.0
  %926 = vmatpush1.msra.mxu0 0.0
  %927 = vmatprep.subr.mxu0 0.0
  %928 = vmatpush1.msra.mxu0 0.0
  %929 = vmatprep.subr.mxu0 0.0
  %930 = vmatpush1.msra.mxu0 0.0
  %931 = vmatprep.subr.mxu0 0.0
  %932 = vmatpush1.msra.mxu0 0.0
  %933 = vmatprep.subr.mxu0 0.0
  %934 = vmatpush1.msra.mxu0 0.0
  %935 = vmatprep.subr.mxu0 0.0
  %936 = vmatpush1.msra.mxu0 0.0
  %937 = vmatprep.subr.mxu0 0.0
  %938 = vmatpush1.msra.mxu0 0.0
  %939 = vmatprep.subr.mxu0 0.0
  %940 = vmatpush1.msra.mxu0 0.0
  %941 = vmatprep.mubr.f32.mxu0 0.0
  %942 = vmatmul.mubr.f32.gmra.mrb[0].mxu0 %v830
  %v943 = vpop.f32.mrb[0].mxu0
  %v944 = vadd.f32 %v828, %v943
  %v945 = vpop.f32.mrb[0].mxu0
  %946 = vmatprep.mubr.f32.mxu0 0.0
  %947 = vmatmul.mubr.f32.gmra.mrb[0].mxu0 %v833
  %v948 = vpop.f32.mrb[0].mxu0
  %v949 = vadd.f32 %v828, %v948
  %v950 = vpop.f32.mrb[0].mxu0
  %951 = vmatprep.mubr.f32.mxu0 0.0
  %952 = vmatmul.mubr.f32.gmra.mrb[0].mxu0 %v836
  %v953 = vpop.f32.mrb[0].mxu0
  %v954 = vadd.f32 %v828, %v953
  %v955 = vpop.f32.mrb[0].mxu0
  %956 = vmatprep.mubr.f32.mxu0 0.0
  %957 = vmatmul.mubr.f32.gmra.mrb[0].mxu0 %v839
  %v958 = vpop.f32.mrb[0].mxu0
  %v959 = vadd.f32 %v828, %v958
  %v960 = vpop.f32.mrb[0].mxu0
  %961 = vmatprep.mubr.f32.mxu0 0.0
  %962 = vmatmul.mubr.f32.gmra.mrb[0].mxu0 %v842
  %v963 = vpop.f32.mrb[0].mxu0
  %v964 = vadd.f32 %v828, %v963
  %v965 = vpop.f32.mrb[0].mxu0
  %966 = vmatprep.mubr.f32.mxu0 0.0
  %967 = vmatmul.mubr.f32.gmra.mrb[0].mxu0 %v845
  %v968 = vpop.f32.mrb[0].mxu0
  %v969 = vadd.f32 %v828, %v968
  %v970 = vpop.f32.mrb[0].mxu0
  %971 = vmatprep.mubr.f32.mxu0 0.0
  %972 = vmatmul.mubr.f32.gmra.mrb[0].mxu0 %v848
  %v973 = vpop.f32.mrb[0].mxu0
  %v974 = vadd.f32 %v828, %v973
  %v975 = vpop.f32.mrb[0].mxu0
  %976 = vmatprep.mubr.f32.mxu0 0.0
  %977 = vmatmul.mubr.f32.gmra.mrb[0].mxu0 %v851
  %v978 = vpop.f32.mrb[0].mxu0
  %v979 = vadd.f32 %v828, %v978
  %v980 = vpop.f32.mrb[0].mxu0
  %981 = vmatprep.mubr.f32.mxu0 0.0
  %982 = vmatmul.mubr.f32.gmra.mrb[0].mxu0 %v854
  %v983 = vpop.f32.mrb[0].mxu0
  %v984 = vadd.f32 %v828, %v983
  %v985 = vpop.f32.mrb[0].mxu0
  %986 = vmatprep.mubr.f32.mxu0 0.0
  %987 = vmatmul.mubr.f32.gmra.mrb[0].mxu0 %v857
  %v988 = vpop.f32.mrb[0].mxu0
  %v989 = vadd.f32 %v828, %v988
  %v990 = vpop.f32.mrb[0].mxu0
  %991 = vmatprep.mubr.f32.mxu0 0.0
  %992 = vmatmul.mubr.f32.gmra.mrb[0].mxu0 %v860
  %v993 = vpop.f32.mrb[0].mxu0
  %v994 = vadd.f32 %v828, %v993
  %v995 = vpop.f32.mrb[0].mxu0
  %996 = vmatprep.mubr.f32.mxu0 0.0
  %997 = vmatmul.mubr.f32.gmra.mrb[0].mxu0 %v863
  %v998 = vpop.f32.mrb[0].mxu0
  %v999 = vadd.f32 %v828, %v998
  %v1000 = vpop.f32.mrb[0].mxu0
  %1001 = vmatprep.mubr.f32.mxu0 0.0
  %1002 = vmatmul.mubr.f32.gmra.mrb[0].mxu0 %v866
  %v1003 = vpop.f32.mrb[0].mxu0
  %v1004 = vadd.f32 %v828, %v1003
  %v1005 = vpop.f32.mrb[0].mxu0
  %1006 = vmatprep.mubr.f32.mxu0 0.0
  %1007 = vmatmul.mubr.f32.gmra.mrb[0].mxu0 %v869
  %v1008 = vpop.f32.mrb[0].mxu0
  %v1009 = vadd.f32 %v828, %v1008
  %v1010 = vpop.f32.mrb[0].mxu0
  %1011 = vmatprep.mubr.f32.mxu0 0.0
  %1012 = vmatmul.mubr.f32.gmra.mrb[0].mxu0 %v872
  %v1013 = vpop.f32.mrb[0].mxu0
  %v1014 = vadd.f32 %v828, %v1013
  %v1015 = vpop.f32.mrb[0].mxu0
  %1016 = vmatprep.mubr.f32.mxu0 0.0
  %1017 = vmatmul.mubr.f32.gmra.mrb[0].mxu0 %v875
  %v1018 = vpop.f32.mrb[0].mxu0
  %v1019 = vadd.f32 %v828, %v1018
  %v1020 = vpop.f32.mrb[0].mxu0
  %1021 = vdwg.mxu0
  %v1022 = vmax.f32 %v944, 0.0
  %v1023 = vmax.f32 %v949, 0.0
  %v1024 = vmax.f32 %v954, 0.0
  %v1025 = vmax.f32 %v959, 0.0
  %v1026 = vmax.f32 %v964, 0.0
  %v1027 = vmax.f32 %v969, 0.0
  %v1028 = vmax.f32 %v974, 0.0
  %v1029 = vmax.f32 %v979, 0.0
  %v1030 = vmax.f32 %v984, 0.0
  %v1031 = vmax.f32 %v989, 0.0
  %v1032 = vmax.f32 %v994, 0.0
  %v1033 = vmax.f32 %v999, 0.0
  %v1034 = vmax.f32 %v1004, 0.0
  %v1035 = vmax.f32 %v1009, 0.0
  %v1036 = vmax.f32 %v1014, 0.0
  %v1037 = vmax.f32 %v1019, 0.0
  %v1039 = vsel %vm361, %v1022, 0
  %v1042 = vsel %vm361, %v1023, 0
  %v1045 = vsel %vm361, %v1024, 0
  %v1048 = vsel %vm361, %v1025, 0
  %v1051 = vsel %vm361, %v1026, 0
  %v1054 = vsel %vm361, %v1027, 0
  %v1057 = vsel %vm361, %v1028, 0
  %v1060 = vsel %vm361, %v1029, 0
  %v1063 = vsel %vm361, %v1030, 0
  %v1066 = vsel %vm361, %v1031, 0
  %v1069 = vsel %vm361, %v1032, 0
  %v1072 = vsel %vm361, %v1033, 0
  %v1075 = vsel %vm361, %v1034, 0
  %v1078 = vsel %vm361, %v1035, 0
  %v1081 = vsel %vm361, %v1036, 0
  %v1084 = vsel %vm361, %v1037, 0
  %1086 = vmatprep.subr.mxu0 0.0
  %1087 = vmatpush1.msra.mxu0 %v112
  %1088 = vmatprep.subr.mxu0 0.0
  %1089 = vmatpush1.msra.mxu0 %v113
  %1090 = vmatprep.subr.mxu0 0.0
  %1091 = vmatpush1.msra.mxu0 %v114
  %1092 = vmatprep.subr.mxu0 0.0
  %1093 = vmatpush1.msra.mxu0 %v115
  %1094 = vmatprep.subr.mxu0 0.0
  %1095 = vmatpush1.msra.mxu0 %v116
  %1096 = vmatprep.subr.mxu0 0.0
  %1097 = vmatpush1.msra.mxu0 %v117
  %1098 = vmatprep.subr.mxu0 0.0
  %1099 = vmatpush1.msra.mxu0 %v118
  %1100 = vmatprep.subr.mxu0 0.0
  %1101 = vmatpush1.msra.mxu0 %v119
  %1102 = vmatprep.subr.mxu0 0.0
  %1103 = vmatpush1.msra.mxu0 %v120
  %1104 = vmatprep.subr.mxu0 0.0
  %1105 = vmatpush1.msra.mxu0 %v121
  %1106 = vmatprep.subr.mxu0 0.0
  %1107 = vmatpush1.msra.mxu0 %v122
  %1108 = vmatprep.subr.mxu0 0.0
  %1109 = vmatpush1.msra.mxu0 %v123
  %1110 = vmatprep.subr.mxu0 0.0
  %1111 = vmatpush1.msra.mxu0 0.0
  %1112 = vmatprep.subr.mxu0 0.0
  %1113 = vmatpush1.msra.mxu0 0.0
  %1114 = vmatprep.subr.mxu0 0.0
  %1115 = vmatpush1.msra.mxu0 0.0
  %1116 = vmatprep.subr.mxu0 0.0
  %1117 = vmatpush1.msra.mxu0 0.0
  %1118 = vmatprep.subr.mxu0 0.0
  %1119 = vmatpush1.msra.mxu0 0.0
  %1120 = vmatprep.subr.mxu0 0.0
  %1121 = vmatpush1.msra.mxu0 0.0
  %1122 = vmatprep.subr.mxu0 0.0
  %1123 = vmatpush1.msra.mxu0 0.0
  %1124 = vmatprep.subr.mxu0 0.0
  %1125 = vmatpush1.msra.mxu0 0.0
  %1126 = vmatprep.subr.mxu0 0.0
  %1127 = vmatpush1.msra.mxu0 0.0
  %1128 = vmatprep.subr.mxu0 0.0
  %1129 = vmatpush1.msra.mxu0 0.0
  %1130 = vmatprep.subr.mxu0 0.0
  %1131 = vmatpush1.msra.mxu0 0.0
  %1132 = vmatprep.subr.mxu0 0.0
  %1133 = vmatpush1.msra.mxu0 0.0
  %1134 = vmatprep.subr.mxu0 0.0
  %1135 = vmatpush1.msra.mxu0 0.0
  %1136 = vmatprep.subr.mxu0 0.0
  %1137 = vmatpush1.msra.mxu0 0.0
  %1138 = vmatprep.subr.mxu0 0.0
  %1139 = vmatpush1.msra.mxu0 0.0
  %1140 = vmatprep.subr.mxu0 0.0
  %1141 = vmatpush1.msra.mxu0 0.0
  %1142 = vmatprep.subr.mxu0 0.0
  %1143 = vmatpush1.msra.mxu0 0.0
  %1144 = vmatprep.subr.mxu0 0.0
  %1145 = vmatpush1.msra.mxu0 0.0
  %1146 = vmatprep.subr.mxu0 0.0
  %1147 = vmatpush1.msra.mxu0 0.0
  %1148 = vmatprep.subr.mxu0 0.0
  %1149 = vmatpush1.msra.mxu0 0.0
  %1150 = vmatprep.mubr.f32.mxu0 0.0
  %1151 = vmatmul.mubr.f32.gmra.mrb[0].mxu0 %v1039
  %v1152 = vpop.f32.mrb[0].mxu0
  %v1153 = vadd.f32 0.0, %v1152
  %v1154 = vpop.f32.mrb[0].mxu0
  %1155 = vmatprep.mubr.f32.mxu0 0.0
  %1156 = vmatmul.mubr.f32.gmra.mrb[0].mxu0 %v1042
  %v1157 = vpop.f32.mrb[0].mxu0
  %v1158 = vadd.f32 0.0, %v1157
  %v1159 = vpop.f32.mrb[0].mxu0
  %1160 = vmatprep.mubr.f32.mxu0 0.0
  %1161 = vmatmul.mubr.f32.gmra.mrb[0].mxu0 %v1045
  %v1162 = vpop.f32.mrb[0].mxu0
  %v1163 = vadd.f32 0.0, %v1162
  %v1164 = vpop.f32.mrb[0].mxu0
  %1165 = vmatprep.mubr.f32.mxu0 0.0
  %1166 = vmatmul.mubr.f32.gmra.mrb[0].mxu0 %v1048
  %v1167 = vpop.f32.mrb[0].mxu0
  %v1168 = vadd.f32 0.0, %v1167
  %v1169 = vpop.f32.mrb[0].mxu0
  %1170 = vmatprep.mubr.f32.mxu0 0.0
  %1171 = vmatmul.mubr.f32.gmra.mrb[0].mxu0 %v1051
  %v1172 = vpop.f32.mrb[0].mxu0
  %v1173 = vadd.f32 0.0, %v1172
  %v1174 = vpop.f32.mrb[0].mxu0
  %1175 = vmatprep.mubr.f32.mxu0 0.0
  %1176 = vmatmul.mubr.f32.gmra.mrb[0].mxu0 %v1054
  %v1177 = vpop.f32.mrb[0].mxu0
  %v1178 = vadd.f32 0.0, %v1177
  %v1179 = vpop.f32.mrb[0].mxu0
  %1180 = vmatprep.mubr.f32.mxu0 0.0
  %1181 = vmatmul.mubr.f32.gmra.mrb[0].mxu0 %v1057
  %v1182 = vpop.f32.mrb[0].mxu0
  %v1183 = vadd.f32 0.0, %v1182
  %v1184 = vpop.f32.mrb[0].mxu0
  %1185 = vmatprep.mubr.f32.mxu0 0.0
  %1186 = vmatmul.mubr.f32.gmra.mrb[0].mxu0 %v1060
  %v1187 = vpop.f32.mrb[0].mxu0
  %v1188 = vadd.f32 0.0, %v1187
  %v1189 = vpop.f32.mrb[0].mxu0
  %1190 = vmatprep.mubr.f32.mxu0 0.0
  %1191 = vmatmul.mubr.f32.gmra.mrb[0].mxu0 %v1063
  %v1192 = vpop.f32.mrb[0].mxu0
  %v1193 = vadd.f32 0.0, %v1192
  %v1194 = vpop.f32.mrb[0].mxu0
  %1195 = vmatprep.mubr.f32.mxu0 0.0
  %1196 = vmatmul.mubr.f32.gmra.mrb[0].mxu0 %v1066
  %v1197 = vpop.f32.mrb[0].mxu0
  %v1198 = vadd.f32 0.0, %v1197
  %v1199 = vpop.f32.mrb[0].mxu0
  %1200 = vmatprep.mubr.f32.mxu0 0.0
  %1201 = vmatmul.mubr.f32.gmra.mrb[0].mxu0 %v1069
  %v1202 = vpop.f32.mrb[0].mxu0
  %v1203 = vadd.f32 0.0, %v1202
  %v1204 = vpop.f32.mrb[0].mxu0
  %1205 = vmatprep.mubr.f32.mxu0 0.0
  %1206 = vmatmul.mubr.f32.gmra.mrb[0].mxu0 %v1072
  %v1207 = vpop.f32.mrb[0].mxu0
  %v1208 = vadd.f32 0.0, %v1207
  %v1209 = vpop.f32.mrb[0].mxu0
  %1210 = vmatprep.mubr.f32.mxu0 0.0
  %1211 = vmatmul.mubr.f32.gmra.mrb[0].mxu0 %v1075
  %v1212 = vpop.f32.mrb[0].mxu0
  %v1213 = vadd.f32 0.0, %v1212
  %v1214 = vpop.f32.mrb[0].mxu0
  %1215 = vmatprep.mubr.f32.mxu0 0.0
  %1216 = vmatmul.mubr.f32.gmra.mrb[0].mxu0 %v1078
  %v1217 = vpop.f32.mrb[0].mxu0
  %v1218 = vadd.f32 0.0, %v1217
  %v1219 = vpop.f32.mrb[0].mxu0
  %1220 = vmatprep.mubr.f32.mxu0 0.0
  %1221 = vmatmul.mubr.f32.gmra.mrb[0].mxu0 %v1081
  %v1222 = vpop.f32.mrb[0].mxu0
  %v1223 = vadd.f32 0.0, %v1222
  %v1224 = vpop.f32.mrb[0].mxu0
  %1225 = vmatprep.mubr.f32.mxu0 0.0
  %1226 = vmatmul.mubr.f32.gmra.mrb[0].mxu0 %v1084
  %v1227 = vpop.f32.mrb[0].mxu0
  %v1228 = vadd.f32 0.0, %v1227
  %v1229 = vpop.f32.mrb[0].mxu0
  %1230 = vdwg.mxu0
  %v1231 = vsub.f32 %v1022, %v1153
  %v1232 = vsub.f32 %v1023, %v1158
  %v1233 = vsub.f32 %v1024, %v1163
  %v1234 = vsub.f32 %v1025, %v1168
  %v1235 = vsub.f32 %v1026, %v1173
  %v1236 = vsub.f32 %v1027, %v1178
  %v1237 = vsub.f32 %v1028, %v1183
  %v1238 = vsub.f32 %v1029, %v1188
  %v1239 = vsub.f32 %v1030, %v1193
  %v1240 = vsub.f32 %v1031, %v1198
  %v1241 = vsub.f32 %v1032, %v1203
  %v1242 = vsub.f32 %v1033, %v1208
  %v1243 = vsub.f32 %v1034, %v1213
  %v1244 = vsub.f32 %v1035, %v1218
  %v1245 = vsub.f32 %v1036, %v1223
  %v1246 = vsub.f32 %v1037, %v1228
  %v1247 = vmul.f32 %v1231, %v1231
  %v1248 = vmul.f32 %v1232, %v1232
  %v1249 = vmul.f32 %v1233, %v1233
  %v1250 = vmul.f32 %v1234, %v1234
  %v1251 = vmul.f32 %v1235, %v1235
  %v1252 = vmul.f32 %v1236, %v1236
  %v1253 = vmul.f32 %v1237, %v1237
  %v1254 = vmul.f32 %v1238, %v1238
  %v1255 = vmul.f32 %v1239, %v1239
  %v1256 = vmul.f32 %v1240, %v1240
  %v1257 = vmul.f32 %v1241, %v1241
  %v1258 = vmul.f32 %v1242, %v1242
  %v1259 = vmul.f32 %v1243, %v1243
  %v1260 = vmul.f32 %v1244, %v1244
  %v1261 = vmul.f32 %v1245, %v1245
  %v1262 = vmul.f32 %v1246, %v1246
  %v1264 = vsel %vm361, %v1247, 0
  %v1267 = vsel %vm361, %v1248, 0
  %v1270 = vsel %vm361, %v1249, 0
  %v1273 = vsel %vm361, %v1250, 0
  %v1276 = vsel %vm361, %v1251, 0
  %v1279 = vsel %vm361, %v1252, 0
  %v1282 = vsel %vm361, %v1253, 0
  %v1285 = vsel %vm361, %v1254, 0
  %v1288 = vsel %vm361, %v1255, 0
  %v1291 = vsel %vm361, %v1256, 0
  %v1294 = vsel %vm361, %v1257, 0
  %v1297 = vsel %vm361, %v1258, 0
  %v1300 = vsel %vm361, %v1259, 0
  %v1303 = vsel %vm361, %v1260, 0
  %v1306 = vsel %vm361, %v1261, 0
  %v1309 = vsel %vm361, %v1262, 0
  %1311 = vmatprep.subr.mxu0 0.0
  %1312 = vmatpush1.msra.mxu0 %v112
  %1313 = vmatprep.subr.mxu0 0.0
  %1314 = vmatpush1.msra.mxu0 %v113
  %1315 = vmatprep.subr.mxu0 0.0
  %1316 = vmatpush1.msra.mxu0 %v114
  %1317 = vmatprep.subr.mxu0 0.0
  %1318 = vmatpush1.msra.mxu0 %v115
  %1319 = vmatprep.subr.mxu0 0.0
  %1320 = vmatpush1.msra.mxu0 %v116
  %1321 = vmatprep.subr.mxu0 0.0
  %1322 = vmatpush1.msra.mxu0 %v117
  %1323 = vmatprep.subr.mxu0 0.0
  %1324 = vmatpush1.msra.mxu0 %v118
  %1325 = vmatprep.subr.mxu0 0.0
  %1326 = vmatpush1.msra.mxu0 %v119
  %1327 = vmatprep.subr.mxu0 0.0
  %1328 = vmatpush1.msra.mxu0 %v120
  %1329 = vmatprep.subr.mxu0 0.0
  %1330 = vmatpush1.msra.mxu0 %v121
  %1331 = vmatprep.subr.mxu0 0.0
  %1332 = vmatpush1.msra.mxu0 %v122
  %1333 = vmatprep.subr.mxu0 0.0
  %1334 = vmatpush1.msra.mxu0 %v123
  %1335 = vmatprep.subr.mxu0 0.0
  %1336 = vmatpush1.msra.mxu0 0.0
  %1337 = vmatprep.subr.mxu0 0.0
  %1338 = vmatpush1.msra.mxu0 0.0
  %1339 = vmatprep.subr.mxu0 0.0
  %1340 = vmatpush1.msra.mxu0 0.0
  %1341 = vmatprep.subr.mxu0 0.0
  %1342 = vmatpush1.msra.mxu0 0.0
  %1343 = vmatprep.subr.mxu0 0.0
  %1344 = vmatpush1.msra.mxu0 0.0
  %1345 = vmatprep.subr.mxu0 0.0
  %1346 = vmatpush1.msra.mxu0 0.0
  %1347 = vmatprep.subr.mxu0 0.0
  %1348 = vmatpush1.msra.mxu0 0.0
  %1349 = vmatprep.subr.mxu0 0.0
  %1350 = vmatpush1.msra.mxu0 0.0
  %1351 = vmatprep.subr.mxu0 0.0
  %1352 = vmatpush1.msra.mxu0 0.0
  %1353 = vmatprep.subr.mxu0 0.0
  %1354 = vmatpush1.msra.mxu0 0.0
  %1355 = vmatprep.subr.mxu0 0.0
  %1356 = vmatpush1.msra.mxu0 0.0
  %1357 = vmatprep.subr.mxu0 0.0
  %1358 = vmatpush1.msra.mxu0 0.0
  %1359 = vmatprep.subr.mxu0 0.0
  %1360 = vmatpush1.msra.mxu0 0.0
  %1361 = vmatprep.subr.mxu0 0.0
  %1362 = vmatpush1.msra.mxu0 0.0
  %1363 = vmatprep.subr.mxu0 0.0
  %1364 = vmatpush1.msra.mxu0 0.0
  %1365 = vmatprep.subr.mxu0 0.0
  %1366 = vmatpush1.msra.mxu0 0.0
  %1367 = vmatprep.subr.mxu0 0.0
  %1368 = vmatpush1.msra.mxu0 0.0
  %1369 = vmatprep.subr.mxu0 0.0
  %1370 = vmatpush1.msra.mxu0 0.0
  %1371 = vmatprep.subr.mxu0 0.0
  %1372 = vmatpush1.msra.mxu0 0.0
  %1373 = vmatprep.subr.mxu0 0.0
  %1374 = vmatpush1.msra.mxu0 0.0
  %1375 = vmatprep.mubr.f32.mxu0 0.0
  %1376 = vmatmul.mubr.f32.gmra.mrb[0].mxu0 %v1264
  %v1377 = vpop.f32.mrb[0].mxu0
  %v1378 = vadd.f32 1e-05, %v1377
  %v1379 = vpop.f32.mrb[0].mxu0
  %1380 = vmatprep.mubr.f32.mxu0 0.0
  %1381 = vmatmul.mubr.f32.gmra.mrb[0].mxu0 %v1267
  %v1382 = vpop.f32.mrb[0].mxu0
  %v1383 = vadd.f32 1e-05, %v1382
  %v1384 = vpop.f32.mrb[0].mxu0
  %1385 = vmatprep.mubr.f32.mxu0 0.0
  %1386 = vmatmul.mubr.f32.gmra.mrb[0].mxu0 %v1270
  %v1387 = vpop.f32.mrb[0].mxu0
  %v1388 = vadd.f32 1e-05, %v1387
  %v1389 = vpop.f32.mrb[0].mxu0
  %1390 = vmatprep.mubr.f32.mxu0 0.0
  %1391 = vmatmul.mubr.f32.gmra.mrb[0].mxu0 %v1273
  %v1392 = vpop.f32.mrb[0].mxu0
  %v1393 = vadd.f32 1e-05, %v1392
  %v1394 = vpop.f32.mrb[0].mxu0
  %1395 = vmatprep.mubr.f32.mxu0 0.0
  %1396 = vmatmul.mubr.f32.gmra.mrb[0].mxu0 %v1276
  %v1397 = vpop.f32.mrb[0].mxu0
  %v1398 = vadd.f32 1e-05, %v1397
  %v1399 = vpop.f32.mrb[0].mxu0
  %1400 = vmatprep.mubr.f32.mxu0 0.0
  %1401 = vmatmul.mubr.f32.gmra.mrb[0].mxu0 %v1279
  %v1402 = vpop.f32.mrb[0].mxu0
  %v1403 = vadd.f32 1e-05, %v1402
  %v1404 = vpop.f32.mrb[0].mxu0
  %1405 = vmatprep.mubr.f32.mxu0 0.0
  %1406 = vmatmul.mubr.f32.gmra.mrb[0].mxu0 %v1282
  %v1407 = vpop.f32.mrb[0].mxu0
  %v1408 = vadd.f32 1e-05, %v1407
  %v1409 = vpop.f32.mrb[0].mxu0
  %1410 = vmatprep.mubr.f32.mxu0 0.0
  %1411 = vmatmul.mubr.f32.gmra.mrb[0].mxu0 %v1285
  %v1412 = vpop.f32.mrb[0].mxu0
  %v1413 = vadd.f32 1e-05, %v1412
  %v1414 = vpop.f32.mrb[0].mxu0
  %1415 = vmatprep.mubr.f32.mxu0 0.0
  %1416 = vmatmul.mubr.f32.gmra.mrb[0].mxu0 %v1288
  %v1417 = vpop.f32.mrb[0].mxu0
  %v1418 = vadd.f32 1e-05, %v1417
  %v1419 = vpop.f32.mrb[0].mxu0
  %1420 = vmatprep.mubr.f32.mxu0 0.0
  %1421 = vmatmul.mubr.f32.gmra.mrb[0].mxu0 %v1291
  %v1422 = vpop.f32.mrb[0].mxu0
  %v1423 = vadd.f32 1e-05, %v1422
  %v1424 = vpop.f32.mrb[0].mxu0
  %1425 = vmatprep.mubr.f32.mxu0 0.0
  %1426 = vmatmul.mubr.f32.gmra.mrb[0].mxu0 %v1294
  %v1427 = vpop.f32.mrb[0].mxu0
  %v1428 = vadd.f32 1e-05, %v1427
  %v1429 = vpop.f32.mrb[0].mxu0
  %1430 = vmatprep.mubr.f32.mxu0 0.0
  %1431 = vmatmul.mubr.f32.gmra.mrb[0].mxu0 %v1297
  %v1432 = vpop.f32.mrb[0].mxu0
  %v1433 = vadd.f32 1e-05, %v1432
  %v1434 = vpop.f32.mrb[0].mxu0
  %1435 = vmatprep.mubr.f32.mxu0 0.0
  %1436 = vmatmul.mubr.f32.gmra.mrb[0].mxu0 %v1300
  %v1437 = vpop.f32.mrb[0].mxu0
  %v1438 = vadd.f32 1e-05, %v1437
  %v1439 = vpop.f32.mrb[0].mxu0
  %1440 = vmatprep.mubr.f32.mxu0 0.0
  %1441 = vmatmul.mubr.f32.gmra.mrb[0].mxu0 %v1303
  %v1442 = vpop.f32.mrb[0].mxu0
  %v1443 = vadd.f32 1e-05, %v1442
  %v1444 = vpop.f32.mrb[0].mxu0
  %1445 = vmatprep.mubr.f32.mxu0 0.0
  %1446 = vmatmul.mubr.f32.gmra.mrb[0].mxu0 %v1306
  %v1447 = vpop.f32.mrb[0].mxu0
  %v1448 = vadd.f32 1e-05, %v1447
  %v1449 = vpop.f32.mrb[0].mxu0
  %1450 = vmatprep.mubr.f32.mxu0 0.0
  %1451 = vmatmul.mubr.f32.gmra.mrb[0].mxu0 %v1309
  %v1452 = vpop.f32.mrb[0].mxu0
  %v1453 = vadd.f32 1e-05, %v1452
  %v1454 = vpop.f32.mrb[0].mxu0
  %1455 = vdwg.mxu0
  %v1456 = vrsqrt.pop %v1378
  %v1457 = vrsqrt.pop %v1383
  %v1458 = vrsqrt.pop %v1388
  %v1459 = vrsqrt.pop %v1393
  %v1460 = vrsqrt.pop %v1398
  %v1461 = vrsqrt.pop %v1403
  %v1462 = vrsqrt.pop %v1408
  %v1463 = vrsqrt.pop %v1413
  %v1464 = vrsqrt.pop %v1418
  %v1465 = vrsqrt.pop %v1423
  %v1466 = vrsqrt.pop %v1428
  %v1467 = vrsqrt.pop %v1433
  %v1468 = vrsqrt.pop %v1438
  %v1469 = vrsqrt.pop %v1443
  %v1470 = vrsqrt.pop %v1448
  %v1471 = vrsqrt.pop %v1453
  %v1472 = vmul.f32 %v1231, %v1456
  %v1473 = vmul.f32 %v1232, %v1457
  %v1474 = vmul.f32 %v1233, %v1458
  %v1475 = vmul.f32 %v1234, %v1459
  %v1476 = vmul.f32 %v1235, %v1460
  %v1477 = vmul.f32 %v1236, %v1461
  %v1478 = vmul.f32 %v1237, %v1462
  %v1479 = vmul.f32 %v1238, %v1463
  %v1480 = vmul.f32 %v1239, %v1464
  %v1481 = vmul.f32 %v1240, %v1465
  %v1482 = vmul.f32 %v1241, %v1466
  %v1483 = vmul.f32 %v1242, %v1467
  %v1484 = vmul.f32 %v1243, %v1468
  %v1485 = vmul.f32 %v1244, %v1469
  %v1486 = vmul.f32 %v1245, %v1470
  %v1487 = vmul.f32 %v1246, %v1471
  %v1488 = vld [vmem:[%s3] sm:$0xff]
  %v1489 = vld [vmem:[%s3 + $0x8] sm:$0xff]
  %v1490 = vld [vmem:[%s3 + $0x10] sm:$0xff]
  %v1491 = vld [vmem:[%s3 + $0x18] sm:$0xff]
  %v1492 = vld [vmem:[%s3 + $0x20] sm:$0xff]
  %v1493 = vld [vmem:[%s3 + $0x28] sm:$0xff]
  %v1494 = vld [vmem:[%s3 + $0x30] sm:$0xff]
  %v1495 = vld [vmem:[%s3 + $0x38] sm:$0xff]
  %v1496 = vld [vmem:[%s3 + $0x40] sm:$0xff]
  %v1497 = vld [vmem:[%s3 + $0x48] sm:$0xff]
  %v1498 = vld [vmem:[%s3 + $0x50] sm:$0xff]
  %v1499 = vld [vmem:[%s3 + $0x58] sm:$0xff]
  %v1500 = vld [vmem:[%s4 + $0x2] sm:$0x1]
  %v1501 = vlaneseq
  %v1502 = vshrl.u32 %v1501, 7
  %v1503 = vsub.s32 0, %v1502
  %v1504 = vrot.slane %v1500, %v1503
  %v1506 = vsel %vm361, %v1472, 0
  %v1509 = vsel %vm361, %v1473, 0
  %v1512 = vsel %vm361, %v1474, 0
  %v1515 = vsel %vm361, %v1475, 0
  %v1518 = vsel %vm361, %v1476, 0
  %v1521 = vsel %vm361, %v1477, 0
  %v1524 = vsel %vm361, %v1478, 0
  %v1527 = vsel %vm361, %v1479, 0
  %v1530 = vsel %vm361, %v1480, 0
  %v1533 = vsel %vm361, %v1481, 0
  %v1536 = vsel %vm361, %v1482, 0
  %v1539 = vsel %vm361, %v1483, 0
  %v1542 = vsel %vm361, %v1484, 0
  %v1545 = vsel %vm361, %v1485, 0
  %v1548 = vsel %vm361, %v1486, 0
  %v1551 = vsel %vm361, %v1487, 0
  %1553 = vmatprep.subr.mxu0 0.0
  %1554 = vmatpush1.msra.mxu0 %v1488
  %1555 = vmatprep.subr.mxu0 0.0
  %1556 = vmatpush1.msra.mxu0 %v1489
  %1557 = vmatprep.subr.mxu0 0.0
  %1558 = vmatpush1.msra.mxu0 %v1490
  %1559 = vmatprep.subr.mxu0 0.0
  %1560 = vmatpush1.msra.mxu0 %v1491
  %1561 = vmatprep.subr.mxu0 0.0
  %1562 = vmatpush1.msra.mxu0 %v1492
  %1563 = vmatprep.subr.mxu0 0.0
  %1564 = vmatpush1.msra.mxu0 %v1493
  %1565 = vmatprep.subr.mxu0 0.0
  %1566 = vmatpush1.msra.mxu0 %v1494
  %1567 = vmatprep.subr.mxu0 0.0
  %1568 = vmatpush1.msra.mxu0 %v1495
  %1569 = vmatprep.subr.mxu0 0.0
  %1570 = vmatpush1.msra.mxu0 %v1496
  %1571 = vmatprep.subr.mxu0 0.0
  %1572 = vmatpush1.msra.mxu0 %v1497
  %1573 = vmatprep.subr.mxu0 0.0
  %1574 = vmatpush1.msra.mxu0 %v1498
  %1575 = vmatprep.subr.mxu0 0.0
  %1576 = vmatpush1.msra.mxu0 %v1499
  %1577 = vmatprep.subr.mxu0 0.0
  %1578 = vmatpush1.msra.mxu0 0.0
  %1579 = vmatprep.subr.mxu0 0.0
  %1580 = vmatpush1.msra.mxu0 0.0
  %1581 = vmatprep.subr.mxu0 0.0
  %1582 = vmatpush1.msra.mxu0 0.0
  %1583 = vmatprep.subr.mxu0 0.0
  %1584 = vmatpush1.msra.mxu0 0.0
  %1585 = vmatprep.subr.mxu0 0.0
  %1586 = vmatpush1.msra.mxu0 0.0
  %1587 = vmatprep.subr.mxu0 0.0
  %1588 = vmatpush1.msra.mxu0 0.0
  %1589 = vmatprep.subr.mxu0 0.0
  %1590 = vmatpush1.msra.mxu0 0.0
  %1591 = vmatprep.subr.mxu0 0.0
  %1592 = vmatpush1.msra.mxu0 0.0
  %1593 = vmatprep.subr.mxu0 0.0
  %1594 = vmatpush1.msra.mxu0 0.0
  %1595 = vmatprep.subr.mxu0 0.0
  %1596 = vmatpush1.msra.mxu0 0.0
  %1597 = vmatprep.subr.mxu0 0.0
  %1598 = vmatpush1.msra.mxu0 0.0
  %1599 = vmatprep.subr.mxu0 0.0
  %1600 = vmatpush1.msra.mxu0 0.0
  %1601 = vmatprep.subr.mxu0 0.0
  %1602 = vmatpush1.msra.mxu0 0.0
  %1603 = vmatprep.subr.mxu0 0.0
  %1604 = vmatpush1.msra.mxu0 0.0
  %1605 = vmatprep.subr.mxu0 0.0
  %1606 = vmatpush1.msra.mxu0 0.0
  %1607 = vmatprep.subr.mxu0 0.0
  %1608 = vmatpush1.msra.mxu0 0.0
  %1609 = vmatprep.subr.mxu0 0.0
  %1610 = vmatpush1.msra.mxu0 0.0
  %1611 = vmatprep.subr.mxu0 0.0
  %1612 = vmatpush1.msra.mxu0 0.0
  %1613 = vmatprep.subr.mxu0 0.0
  %1614 = vmatpush1.msra.mxu0 0.0
  %1615 = vmatprep.subr.mxu0 0.0
  %1616 = vmatpush1.msra.mxu0 0.0
  %1617 = vmatprep.mubr.f32.mxu0 0.0
  %1618 = vmatmul.mubr.f32.gmra.mrb[0].mxu0 %v1506
  %v1619 = vpop.f32.mrb[0].mxu0
  %v1620 = vadd.f32 %v1504, %v1619
  %v1621 = vpop.f32.mrb[0].mxu0
  %1622 = vmatprep.mubr.f32.mxu0 0.0
  %1623 = vmatmul.mubr.f32.gmra.mrb[0].mxu0 %v1509
  %v1624 = vpop.f32.mrb[0].mxu0
  %v1625 = vadd.f32 %v1504, %v1624
  %v1626 = vpop.f32.mrb[0].mxu0
  %1627 = vmatprep.mubr.f32.mxu0 0.0
  %1628 = vmatmul.mubr.f32.gmra.mrb[0].mxu0 %v1512
  %v1629 = vpop.f32.mrb[0].mxu0
  %v1630 = vadd.f32 %v1504, %v1629
  %v1631 = vpop.f32.mrb[0].mxu0
  %1632 = vmatprep.mubr.f32.mxu0 0.0
  %1633 = vmatmul.mubr.f32.gmra.mrb[0].mxu0 %v1515
  %v1634 = vpop.f32.mrb[0].mxu0
  %v1635 = vadd.f32 %v1504, %v1634
  %v1636 = vpop.f32.mrb[0].mxu0
  %1637 = vmatprep.mubr.f32.mxu0 0.0
  %1638 = vmatmul.mubr.f32.gmra.mrb[0].mxu0 %v1518
  %v1639 = vpop.f32.mrb[0].mxu0
  %v1640 = vadd.f32 %v1504, %v1639
  %v1641 = vpop.f32.mrb[0].mxu0
  %1642 = vmatprep.mubr.f32.mxu0 0.0
  %1643 = vmatmul.mubr.f32.gmra.mrb[0].mxu0 %v1521
  %v1644 = vpop.f32.mrb[0].mxu0
  %v1645 = vadd.f32 %v1504, %v1644
  %v1646 = vpop.f32.mrb[0].mxu0
  %1647 = vmatprep.mubr.f32.mxu0 0.0
  %1648 = vmatmul.mubr.f32.gmra.mrb[0].mxu0 %v1524
  %v1649 = vpop.f32.mrb[0].mxu0
  %v1650 = vadd.f32 %v1504, %v1649
  %v1651 = vpop.f32.mrb[0].mxu0
  %1652 = vmatprep.mubr.f32.mxu0 0.0
  %1653 = vmatmul.mubr.f32.gmra.mrb[0].mxu0 %v1527
  %v1654 = vpop.f32.mrb[0].mxu0
  %v1655 = vadd.f32 %v1504, %v1654
  %v1656 = vpop.f32.mrb[0].mxu0
  %1657 = vmatprep.mubr.f32.mxu0 0.0
  %1658 = vmatmul.mubr.f32.gmra.mrb[0].mxu0 %v1530
  %v1659 = vpop.f32.mrb[0].mxu0
  %v1660 = vadd.f32 %v1504, %v1659
  %v1661 = vpop.f32.mrb[0].mxu0
  %1662 = vmatprep.mubr.f32.mxu0 0.0
  %1663 = vmatmul.mubr.f32.gmra.mrb[0].mxu0 %v1533
  %v1664 = vpop.f32.mrb[0].mxu0
  %v1665 = vadd.f32 %v1504, %v1664
  %v1666 = vpop.f32.mrb[0].mxu0
  %1667 = vmatprep.mubr.f32.mxu0 0.0
  %1668 = vmatmul.mubr.f32.gmra.mrb[0].mxu0 %v1536
  %v1669 = vpop.f32.mrb[0].mxu0
  %v1670 = vadd.f32 %v1504, %v1669
  %v1671 = vpop.f32.mrb[0].mxu0
  %1672 = vmatprep.mubr.f32.mxu0 0.0
  %1673 = vmatmul.mubr.f32.gmra.mrb[0].mxu0 %v1539
  %v1674 = vpop.f32.mrb[0].mxu0
  %v1675 = vadd.f32 %v1504, %v1674
  %v1676 = vpop.f32.mrb[0].mxu0
  %1677 = vmatprep.mubr.f32.mxu0 0.0
  %1678 = vmatmul.mubr.f32.gmra.mrb[0].mxu0 %v1542
  %v1679 = vpop.f32.mrb[0].mxu0
  %v1680 = vadd.f32 %v1504, %v1679
  %v1681 = vpop.f32.mrb[0].mxu0
  %1682 = vmatprep.mubr.f32.mxu0 0.0
  %1683 = vmatmul.mubr.f32.gmra.mrb[0].mxu0 %v1545
  %v1684 = vpop.f32.mrb[0].mxu0
  %v1685 = vadd.f32 %v1504, %v1684
  %v1686 = vpop.f32.mrb[0].mxu0
  %1687 = vmatprep.mubr.f32.mxu0 0.0
  %1688 = vmatmul.mubr.f32.gmra.mrb[0].mxu0 %v1548
  %v1689 = vpop.f32.mrb[0].mxu0
  %v1690 = vadd.f32 %v1504, %v1689
  %v1691 = vpop.f32.mrb[0].mxu0
  %1692 = vmatprep.mubr.f32.mxu0 0.0
  %1693 = vmatmul.mubr.f32.gmra.mrb[0].mxu0 %v1551
  %v1694 = vpop.f32.mrb[0].mxu0
  %v1695 = vadd.f32 %v1504, %v1694
  %v1696 = vpop.f32.mrb[0].mxu0
  %1697 = vdwg.mxu0
  %v1698 = vmax.f32 %v1620, 0.0
  %v1699 = vmax.f32 %v1625, 0.0
  %v1700 = vmax.f32 %v1630, 0.0
  %v1701 = vmax.f32 %v1635, 0.0
  %v1702 = vmax.f32 %v1640, 0.0
  %v1703 = vmax.f32 %v1645, 0.0
  %v1704 = vmax.f32 %v1650, 0.0
  %v1705 = vmax.f32 %v1655, 0.0
  %v1706 = vmax.f32 %v1660, 0.0
  %v1707 = vmax.f32 %v1665, 0.0
  %v1708 = vmax.f32 %v1670, 0.0
  %v1709 = vmax.f32 %v1675, 0.0
  %v1710 = vmax.f32 %v1680, 0.0
  %v1711 = vmax.f32 %v1685, 0.0
  %v1712 = vmax.f32 %v1690, 0.0
  %v1713 = vmax.f32 %v1695, 0.0
  %vm1714 = vcmask 261120
  %v1715 = vsel %vm1714, %v1698, 0.0
  %1716 = vadd.xlane.f32.xlu0 %v1715
  %v1717 = vpop.xlane.xlu0 %1716
  %v1718 = vsel %vm1714, %v1699, 0.0
  %1719 = vadd.xlane.f32.xlu0 %v1718
  %v1720 = vpop.xlane.xlu0 %1719
  %v1721 = vsel %vm1714, %v1700, 0.0
  %1722 = vadd.xlane.f32.xlu0 %v1721
  %v1723 = vpop.xlane.xlu0 %1722
  %v1724 = vsel %vm1714, %v1701, 0.0
  %1725 = vadd.xlane.f32.xlu0 %v1724
  %v1726 = vpop.xlane.xlu0 %1725
  %v1727 = vsel %vm1714, %v1702, 0.0
  %1728 = vadd.xlane.f32.xlu0 %v1727
  %v1729 = vpop.xlane.xlu0 %1728
  %v1730 = vsel %vm1714, %v1703, 0.0
  %1731 = vadd.xlane.f32.xlu0 %v1730
  %v1732 = vpop.xlane.xlu0 %1731
  %v1733 = vsel %vm1714, %v1704, 0.0
  %1734 = vadd.xlane.f32.xlu0 %v1733
  %v1735 = vpop.xlane.xlu0 %1734
  %v1736 = vsel %vm1714, %v1705, 0.0
  %1737 = vadd.xlane.f32.xlu0 %v1736
  %v1738 = vpop.xlane.xlu0 %1737
  %v1739 = vsel %vm1714, %v1706, 0.0
  %1740 = vadd.xlane.f32.xlu0 %v1739
  %v1741 = vpop.xlane.xlu0 %1740
  %v1742 = vsel %vm1714, %v1707, 0.0
  %1743 = vadd.xlane.f32.xlu0 %v1742
  %v1744 = vpop.xlane.xlu0 %1743
  %v1745 = vsel %vm1714, %v1708, 0.0
  %1746 = vadd.xlane.f32.xlu0 %v1745
  %v1747 = vpop.xlane.xlu0 %1746
  %v1748 = vsel %vm1714, %v1709, 0.0
  %1749 = vadd.xlane.f32.xlu0 %v1748
  %v1750 = vpop.xlane.xlu0 %1749
  %v1751 = vsel %vm1714, %v1710, 0.0
  %1752 = vadd.xlane.f32.xlu0 %v1751
  %v1753 = vpop.xlane.xlu0 %1752
  %v1754 = vsel %vm1714, %v1711, 0.0
  %1755 = vadd.xlane.f32.xlu0 %v1754
  %v1756 = vpop.xlane.xlu0 %1755
  %v1757 = vsel %vm1714, %v1712, 0.0
  %1758 = vadd.xlane.f32.xlu0 %v1757
  %v1759 = vpop.xlane.xlu0 %1758
  %v1760 = vsel %vm1714, %v1713, 0.0
  %1761 = vadd.xlane.f32.xlu0 %v1760
  %v1762 = vpop.xlane.xlu0 %1761
  %v1763 = vrcp.pop 32.0
  %v1764 = vmul.f32 %v1717, %v1763
  %v1765 = vmul.f32 %v1720, %v1763
  %v1766 = vmul.f32 %v1723, %v1763
  %v1767 = vmul.f32 %v1726, %v1763
  %v1768 = vmul.f32 %v1729, %v1763
  %v1769 = vmul.f32 %v1732, %v1763
  %v1770 = vmul.f32 %v1735, %v1763
  %v1771 = vmul.f32 %v1738, %v1763
  %v1772 = vmul.f32 %v1741, %v1763
  %v1773 = vmul.f32 %v1744, %v1763
  %v1774 = vmul.f32 %v1747, %v1763
  %v1775 = vmul.f32 %v1750, %v1763
  %v1776 = vmul.f32 %v1753, %v1763
  %v1777 = vmul.f32 %v1756, %v1763
  %v1778 = vmul.f32 %v1759, %v1763
  %v1779 = vmul.f32 %v1762, %v1763
  %v1780 = vsub.f32 %v1698, %v1764
  %v1781 = vsub.f32 %v1699, %v1765
  %v1782 = vsub.f32 %v1700, %v1766
  %v1783 = vsub.f32 %v1701, %v1767
  %v1784 = vsub.f32 %v1702, %v1768
  %v1785 = vsub.f32 %v1703, %v1769
  %v1786 = vsub.f32 %v1704, %v1770
  %v1787 = vsub.f32 %v1705, %v1771
  %v1788 = vsub.f32 %v1706, %v1772
  %v1789 = vsub.f32 %v1707, %v1773
  %v1790 = vsub.f32 %v1708, %v1774
  %v1791 = vsub.f32 %v1709, %v1775
  %v1792 = vsub.f32 %v1710, %v1776
  %v1793 = vsub.f32 %v1711, %v1777
  %v1794 = vsub.f32 %v1712, %v1778
  %v1795 = vsub.f32 %v1713, %v1779
  %v1796 = vmul.f32 %v1780, %v1780
  %v1797 = vmul.f32 %v1781, %v1781
  %v1798 = vmul.f32 %v1782, %v1782
  %v1799 = vmul.f32 %v1783, %v1783
  %v1800 = vmul.f32 %v1784, %v1784
  %v1801 = vmul.f32 %v1785, %v1785
  %v1802 = vmul.f32 %v1786, %v1786
  %v1803 = vmul.f32 %v1787, %v1787
  %v1804 = vmul.f32 %v1788, %v1788
  %v1805 = vmul.f32 %v1789, %v1789
  %v1806 = vmul.f32 %v1790, %v1790
  %v1807 = vmul.f32 %v1791, %v1791
  %v1808 = vmul.f32 %v1792, %v1792
  %v1809 = vmul.f32 %v1793, %v1793
  %v1810 = vmul.f32 %v1794, %v1794
  %v1811 = vmul.f32 %v1795, %v1795
  %v1812 = vsel %vm1714, %v1796, 0.0
  %1813 = vadd.xlane.f32.xlu0 %v1812
  %v1814 = vpop.xlane.xlu0 %1813
  %v1815 = vsel %vm1714, %v1797, 0.0
  %1816 = vadd.xlane.f32.xlu0 %v1815
  %v1817 = vpop.xlane.xlu0 %1816
  %v1818 = vsel %vm1714, %v1798, 0.0
  %1819 = vadd.xlane.f32.xlu0 %v1818
  %v1820 = vpop.xlane.xlu0 %1819
  %v1821 = vsel %vm1714, %v1799, 0.0
  %1822 = vadd.xlane.f32.xlu0 %v1821
  %v1823 = vpop.xlane.xlu0 %1822
  %v1824 = vsel %vm1714, %v1800, 0.0
  %1825 = vadd.xlane.f32.xlu0 %v1824
  %v1826 = vpop.xlane.xlu0 %1825
  %v1827 = vsel %vm1714, %v1801, 0.0
  %1828 = vadd.xlane.f32.xlu0 %v1827
  %v1829 = vpop.xlane.xlu0 %1828
  %v1830 = vsel %vm1714, %v1802, 0.0
  %1831 = vadd.xlane.f32.xlu0 %v1830
  %v1832 = vpop.xlane.xlu0 %1831
  %v1833 = vsel %vm1714, %v1803, 0.0
  %1834 = vadd.xlane.f32.xlu0 %v1833
  %v1835 = vpop.xlane.xlu0 %1834
  %v1836 = vsel %vm1714, %v1804, 0.0
  %1837 = vadd.xlane.f32.xlu0 %v1836
  %v1838 = vpop.xlane.xlu0 %1837
  %v1839 = vsel %vm1714, %v1805, 0.0
  %1840 = vadd.xlane.f32.xlu0 %v1839
  %v1841 = vpop.xlane.xlu0 %1840
  %v1842 = vsel %vm1714, %v1806, 0.0
  %1843 = vadd.xlane.f32.xlu0 %v1842
  %v1844 = vpop.xlane.xlu0 %1843
  %v1845 = vsel %vm1714, %v1807, 0.0
  %1846 = vadd.xlane.f32.xlu0 %v1845
  %v1847 = vpop.xlane.xlu0 %1846
  %v1848 = vsel %vm1714, %v1808, 0.0
  %1849 = vadd.xlane.f32.xlu0 %v1848
  %v1850 = vpop.xlane.xlu0 %1849
  %v1851 = vsel %vm1714, %v1809, 0.0
  %1852 = vadd.xlane.f32.xlu0 %v1851
  %v1853 = vpop.xlane.xlu0 %1852
  %v1854 = vsel %vm1714, %v1810, 0.0
  %1855 = vadd.xlane.f32.xlu0 %v1854
  %v1856 = vpop.xlane.xlu0 %1855
  %v1857 = vsel %vm1714, %v1811, 0.0
  %1858 = vadd.xlane.f32.xlu0 %v1857
  %v1859 = vpop.xlane.xlu0 %1858
  %v1860 = vmul.f32 %v1814, %v1763
  %v1861 = vmul.f32 %v1817, %v1763
  %v1862 = vmul.f32 %v1820, %v1763
  %v1863 = vmul.f32 %v1823, %v1763
  %v1864 = vmul.f32 %v1826, %v1763
  %v1865 = vmul.f32 %v1829, %v1763
  %v1866 = vmul.f32 %v1832, %v1763
  %v1867 = vmul.f32 %v1835, %v1763
  %v1868 = vmul.f32 %v1838, %v1763
  %v1869 = vmul.f32 %v1841, %v1763
  %v1870 = vmul.f32 %v1844, %v1763
  %v1871 = vmul.f32 %v1847, %v1763
  %v1872 = vmul.f32 %v1850, %v1763
  %v1873 = vmul.f32 %v1853, %v1763
  %v1874 = vmul.f32 %v1856, %v1763
  %v1875 = vmul.f32 %v1859, %v1763
  %v1876 = vadd.f32 %v1860, 1e-05
  %v1877 = vadd.f32 %v1861, 1e-05
  %v1878 = vadd.f32 %v1862, 1e-05
  %v1879 = vadd.f32 %v1863, 1e-05
  %v1880 = vadd.f32 %v1864, 1e-05
  %v1881 = vadd.f32 %v1865, 1e-05
  %v1882 = vadd.f32 %v1866, 1e-05
  %v1883 = vadd.f32 %v1867, 1e-05
  %v1884 = vadd.f32 %v1868, 1e-05
  %v1885 = vadd.f32 %v1869, 1e-05
  %v1886 = vadd.f32 %v1870, 1e-05
  %v1887 = vadd.f32 %v1871, 1e-05
  %v1888 = vadd.f32 %v1872, 1e-05
  %v1889 = vadd.f32 %v1873, 1e-05
  %v1890 = vadd.f32 %v1874, 1e-05
  %v1891 = vadd.f32 %v1875, 1e-05
  %v1892 = vrsqrt.pop %v1876
  %v1893 = vrsqrt.pop %v1877
  %v1894 = vrsqrt.pop %v1878
  %v1895 = vrsqrt.pop %v1879
  %v1896 = vrsqrt.pop %v1880
  %v1897 = vrsqrt.pop %v1881
  %v1898 = vrsqrt.pop %v1882
  %v1899 = vrsqrt.pop %v1883
  %v1900 = vrsqrt.pop %v1884
  %v1901 = vrsqrt.pop %v1885
  %v1902 = vrsqrt.pop %v1886
  %v1903 = vrsqrt.pop %v1887
  %v1904 = vrsqrt.pop %v1888
  %v1905 = vrsqrt.pop %v1889
  %v1906 = vrsqrt.pop %v1890
  %v1907 = vrsqrt.pop %v1891
  %v1908 = vmul.f32 %v1780, %v1892
  %v1909 = vmul.f32 %v1781, %v1893
  %v1910 = vmul.f32 %v1782, %v1894
  %v1911 = vmul.f32 %v1783, %v1895
  %v1912 = vmul.f32 %v1784, %v1896
  %v1913 = vmul.f32 %v1785, %v1897
  %v1914 = vmul.f32 %v1786, %v1898
  %v1915 = vmul.f32 %v1787, %v1899
  %v1916 = vmul.f32 %v1788, %v1900
  %v1917 = vmul.f32 %v1789, %v1901
  %v1918 = vmul.f32 %v1790, %v1902
  %v1919 = vmul.f32 %v1791, %v1903
  %v1920 = vmul.f32 %v1792, %v1904
  %v1921 = vmul.f32 %v1793, %v1905
  %v1922 = vmul.f32 %v1794, %v1906
  %v1923 = vmul.f32 %v1795, %v1907
  %v1924 = vld [vmem:[%s3 + $0x60] sm:$0xff]
  %v1925 = vld [vmem:[%s3 + $0x68] sm:$0xff]
  %v1926 = vld [vmem:[%s3 + $0x70] sm:$0xff]
  %v1927 = vld [vmem:[%s3 + $0x78] sm:$0xff]
  %v1928 = vld [vmem:[%s4 + $0x3] sm:$0x1]
  %v1929 = vlaneseq
  %v1930 = vshrl.u32 %v1929, 7
  %v1931 = vsub.s32 0, %v1930
  %v1932 = vrot.slane %v1928, %v1931
  %v1934 = vsel %vm1714, %v1908, 0
  %v1937 = vsel %vm1714, %v1909, 0
  %v1940 = vsel %vm1714, %v1910, 0
  %v1943 = vsel %vm1714, %v1911, 0
  %v1946 = vsel %vm1714, %v1912, 0
  %v1949 = vsel %vm1714, %v1913, 0
  %v1952 = vsel %vm1714, %v1914, 0
  %v1955 = vsel %vm1714, %v1915, 0
  %v1958 = vsel %vm1714, %v1916, 0
  %v1961 = vsel %vm1714, %v1917, 0
  %v1964 = vsel %vm1714, %v1918, 0
  %v1967 = vsel %vm1714, %v1919, 0
  %v1970 = vsel %vm1714, %v1920, 0
  %v1973 = vsel %vm1714, %v1921, 0
  %v1976 = vsel %vm1714, %v1922, 0
  %v1979 = vsel %vm1714, %v1923, 0
  %1981 = vmatprep.subr.mxu0 0.0
  %1982 = vmatpush1.msra.mxu0 %v1924
  %1983 = vmatprep.subr.mxu0 0.0
  %1984 = vmatpush1.msra.mxu0 %v1925
  %1985 = vmatprep.subr.mxu0 0.0
  %1986 = vmatpush1.msra.mxu0 %v1926
  %1987 = vmatprep.subr.mxu0 0.0
  %1988 = vmatpush1.msra.mxu0 %v1927
  %1989 = vmatprep.subr.mxu0 0.0
  %1990 = vmatpush1.msra.mxu0 0.0
  %1991 = vmatprep.subr.mxu0 0.0
  %1992 = vmatpush1.msra.mxu0 0.0
  %1993 = vmatprep.subr.mxu0 0.0
  %1994 = vmatpush1.msra.mxu0 0.0
  %1995 = vmatprep.subr.mxu0 0.0
  %1996 = vmatpush1.msra.mxu0 0.0
  %1997 = vmatprep.subr.mxu0 0.0
  %1998 = vmatpush1.msra.mxu0 0.0
  %1999 = vmatprep.subr.mxu0 0.0
  %2000 = vmatpush1.msra.mxu0 0.0
  %2001 = vmatprep.subr.mxu0 0.0
  %2002 = vmatpush1.msra.mxu0 0.0
  %2003 = vmatprep.subr.mxu0 0.0
  %2004 = vmatpush1.msra.mxu0 0.0
  %2005 = vmatprep.subr.mxu0 0.0
  %2006 = vmatpush1.msra.mxu0 0.0
  %2007 = vmatprep.subr.mxu0 0.0
  %2008 = vmatpush1.msra.mxu0 0.0
  %2009 = vmatprep.subr.mxu0 0.0
  %2010 = vmatpush1.msra.mxu0 0.0
  %2011 = vmatprep.subr.mxu0 0.0
  %2012 = vmatpush1.msra.mxu0 0.0
  %2013 = vmatprep.subr.mxu0 0.0
  %2014 = vmatpush1.msra.mxu0 0.0
  %2015 = vmatprep.subr.mxu0 0.0
  %2016 = vmatpush1.msra.mxu0 0.0
  %2017 = vmatprep.subr.mxu0 0.0
  %2018 = vmatpush1.msra.mxu0 0.0
  %2019 = vmatprep.subr.mxu0 0.0
  %2020 = vmatpush1.msra.mxu0 0.0
  %2021 = vmatprep.subr.mxu0 0.0
  %2022 = vmatpush1.msra.mxu0 0.0
  %2023 = vmatprep.subr.mxu0 0.0
  %2024 = vmatpush1.msra.mxu0 0.0
  %2025 = vmatprep.subr.mxu0 0.0
  %2026 = vmatpush1.msra.mxu0 0.0
  %2027 = vmatprep.subr.mxu0 0.0
  %2028 = vmatpush1.msra.mxu0 0.0
  %2029 = vmatprep.subr.mxu0 0.0
  %2030 = vmatpush1.msra.mxu0 0.0
  %2031 = vmatprep.subr.mxu0 0.0
  %2032 = vmatpush1.msra.mxu0 0.0
  %2033 = vmatprep.subr.mxu0 0.0
  %2034 = vmatpush1.msra.mxu0 0.0
  %2035 = vmatprep.subr.mxu0 0.0
  %2036 = vmatpush1.msra.mxu0 0.0
  %2037 = vmatprep.subr.mxu0 0.0
  %2038 = vmatpush1.msra.mxu0 0.0
  %2039 = vmatprep.subr.mxu0 0.0
  %2040 = vmatpush1.msra.mxu0 0.0
  %2041 = vmatprep.subr.mxu0 0.0
  %2042 = vmatpush1.msra.mxu0 0.0
  %2043 = vmatprep.subr.mxu0 0.0
  %2044 = vmatpush1.msra.mxu0 0.0
  %2045 = vmatprep.mubr.f32.mxu0 0.0
  %2046 = vmatmul.mubr.f32.gmra.mrb[0].mxu0 %v1934
  %v2047 = vpop.f32.mrb[0].mxu0
  %v2048 = vadd.f32 %v1932, %v2047
  %v2049 = vpop.f32.mrb[0].mxu0
  %2050 = vmatprep.mubr.f32.mxu0 0.0
  %2051 = vmatmul.mubr.f32.gmra.mrb[0].mxu0 %v1937
  %v2052 = vpop.f32.mrb[0].mxu0
  %v2053 = vadd.f32 %v1932, %v2052
  %v2054 = vpop.f32.mrb[0].mxu0
  %2055 = vmatprep.mubr.f32.mxu0 0.0
  %2056 = vmatmul.mubr.f32.gmra.mrb[0].mxu0 %v1940
  %v2057 = vpop.f32.mrb[0].mxu0
  %v2058 = vadd.f32 %v1932, %v2057
  %v2059 = vpop.f32.mrb[0].mxu0
  %2060 = vmatprep.mubr.f32.mxu0 0.0
  %2061 = vmatmul.mubr.f32.gmra.mrb[0].mxu0 %v1943
  %v2062 = vpop.f32.mrb[0].mxu0
  %v2063 = vadd.f32 %v1932, %v2062
  %v2064 = vpop.f32.mrb[0].mxu0
  %2065 = vmatprep.mubr.f32.mxu0 0.0
  %2066 = vmatmul.mubr.f32.gmra.mrb[0].mxu0 %v1946
  %v2067 = vpop.f32.mrb[0].mxu0
  %v2068 = vadd.f32 %v1932, %v2067
  %v2069 = vpop.f32.mrb[0].mxu0
  %2070 = vmatprep.mubr.f32.mxu0 0.0
  %2071 = vmatmul.mubr.f32.gmra.mrb[0].mxu0 %v1949
  %v2072 = vpop.f32.mrb[0].mxu0
  %v2073 = vadd.f32 %v1932, %v2072
  %v2074 = vpop.f32.mrb[0].mxu0
  %2075 = vmatprep.mubr.f32.mxu0 0.0
  %2076 = vmatmul.mubr.f32.gmra.mrb[0].mxu0 %v1952
  %v2077 = vpop.f32.mrb[0].mxu0
  %v2078 = vadd.f32 %v1932, %v2077
  %v2079 = vpop.f32.mrb[0].mxu0
  %2080 = vmatprep.mubr.f32.mxu0 0.0
  %2081 = vmatmul.mubr.f32.gmra.mrb[0].mxu0 %v1955
  %v2082 = vpop.f32.mrb[0].mxu0
  %v2083 = vadd.f32 %v1932, %v2082
  %v2084 = vpop.f32.mrb[0].mxu0
  %2085 = vmatprep.mubr.f32.mxu0 0.0
  %2086 = vmatmul.mubr.f32.gmra.mrb[0].mxu0 %v1958
  %v2087 = vpop.f32.mrb[0].mxu0
  %v2088 = vadd.f32 %v1932, %v2087
  %v2089 = vpop.f32.mrb[0].mxu0
  %2090 = vmatprep.mubr.f32.mxu0 0.0
  %2091 = vmatmul.mubr.f32.gmra.mrb[0].mxu0 %v1961
  %v2092 = vpop.f32.mrb[0].mxu0
  %v2093 = vadd.f32 %v1932, %v2092
  %v2094 = vpop.f32.mrb[0].mxu0
  %2095 = vmatprep.mubr.f32.mxu0 0.0
  %2096 = vmatmul.mubr.f32.gmra.mrb[0].mxu0 %v1964
  %v2097 = vpop.f32.mrb[0].mxu0
  %v2098 = vadd.f32 %v1932, %v2097
  %v2099 = vpop.f32.mrb[0].mxu0
  %2100 = vmatprep.mubr.f32.mxu0 0.0
  %2101 = vmatmul.mubr.f32.gmra.mrb[0].mxu0 %v1967
  %v2102 = vpop.f32.mrb[0].mxu0
  %v2103 = vadd.f32 %v1932, %v2102
  %v2104 = vpop.f32.mrb[0].mxu0
  %2105 = vmatprep.mubr.f32.mxu0 0.0
  %2106 = vmatmul.mubr.f32.gmra.mrb[0].mxu0 %v1970
  %v2107 = vpop.f32.mrb[0].mxu0
  %v2108 = vadd.f32 %v1932, %v2107
  %v2109 = vpop.f32.mrb[0].mxu0
  %2110 = vmatprep.mubr.f32.mxu0 0.0
  %2111 = vmatmul.mubr.f32.gmra.mrb[0].mxu0 %v1973
  %v2112 = vpop.f32.mrb[0].mxu0
  %v2113 = vadd.f32 %v1932, %v2112
  %v2114 = vpop.f32.mrb[0].mxu0
  %2115 = vmatprep.mubr.f32.mxu0 0.0
  %2116 = vmatmul.mubr.f32.gmra.mrb[0].mxu0 %v1976
  %v2117 = vpop.f32.mrb[0].mxu0
  %v2118 = vadd.f32 %v1932, %v2117
  %v2119 = vpop.f32.mrb[0].mxu0
  %2120 = vmatprep.mubr.f32.mxu0 0.0
  %2121 = vmatmul.mubr.f32.gmra.mrb[0].mxu0 %v1979
  %v2122 = vpop.f32.mrb[0].mxu0
  %v2123 = vadd.f32 %v1932, %v2122
  %v2124 = vpop.f32.mrb[0].mxu0
  %2125 = vdwg.mxu0
  %v2126 = vmax.f32 %v2048, 0.0
  %v2127 = vmax.f32 %v2053, 0.0
  %v2128 = vmax.f32 %v2058, 0.0
  %v2129 = vmax.f32 %v2063, 0.0
  %v2130 = vmax.f32 %v2068, 0.0
  %v2131 = vmax.f32 %v2073, 0.0
  %v2132 = vmax.f32 %v2078, 0.0
  %v2133 = vmax.f32 %v2083, 0.0
  %v2134 = vmax.f32 %v2088, 0.0
  %v2135 = vmax.f32 %v2093, 0.0
  %v2136 = vmax.f32 %v2098, 0.0
  %v2137 = vmax.f32 %v2103, 0.0
  %v2138 = vmax.f32 %v2108, 0.0
  %v2139 = vmax.f32 %v2113, 0.0
  %v2140 = vmax.f32 %v2118, 0.0
  %v2141 = vmax.f32 %v2123, 0.0
  %v2142 = vsel %vm1714, %v2126, 0.0
  %2143 = vadd.xlane.f32.xlu0 %v2142
  %v2144 = vpop.xlane.xlu0 %2143
  %v2145 = vsel %vm1714, %v2127, 0.0
  %2146 = vadd.xlane.f32.xlu0 %v2145
  %v2147 = vpop.xlane.xlu0 %2146
  %v2148 = vsel %vm1714, %v2128, 0.0
  %2149 = vadd.xlane.f32.xlu0 %v2148
  %v2150 = vpop.xlane.xlu0 %2149
  %v2151 = vsel %vm1714, %v2129, 0.0
  %2152 = vadd.xlane.f32.xlu0 %v2151
  %v2153 = vpop.xlane.xlu0 %2152
  %v2154 = vsel %vm1714, %v2130, 0.0
  %2155 = vadd.xlane.f32.xlu0 %v2154
  %v2156 = vpop.xlane.xlu0 %2155
  %v2157 = vsel %vm1714, %v2131, 0.0
  %2158 = vadd.xlane.f32.xlu0 %v2157
  %v2159 = vpop.xlane.xlu0 %2158
  %v2160 = vsel %vm1714, %v2132, 0.0
  %2161 = vadd.xlane.f32.xlu0 %v2160
  %v2162 = vpop.xlane.xlu0 %2161
  %v2163 = vsel %vm1714, %v2133, 0.0
  %2164 = vadd.xlane.f32.xlu0 %v2163
  %v2165 = vpop.xlane.xlu0 %2164
  %v2166 = vsel %vm1714, %v2134, 0.0
  %2167 = vadd.xlane.f32.xlu0 %v2166
  %v2168 = vpop.xlane.xlu0 %2167
  %v2169 = vsel %vm1714, %v2135, 0.0
  %2170 = vadd.xlane.f32.xlu0 %v2169
  %v2171 = vpop.xlane.xlu0 %2170
  %v2172 = vsel %vm1714, %v2136, 0.0
  %2173 = vadd.xlane.f32.xlu0 %v2172
  %v2174 = vpop.xlane.xlu0 %2173
  %v2175 = vsel %vm1714, %v2137, 0.0
  %2176 = vadd.xlane.f32.xlu0 %v2175
  %v2177 = vpop.xlane.xlu0 %2176
  %v2178 = vsel %vm1714, %v2138, 0.0
  %2179 = vadd.xlane.f32.xlu0 %v2178
  %v2180 = vpop.xlane.xlu0 %2179
  %v2181 = vsel %vm1714, %v2139, 0.0
  %2182 = vadd.xlane.f32.xlu0 %v2181
  %v2183 = vpop.xlane.xlu0 %2182
  %v2184 = vsel %vm1714, %v2140, 0.0
  %2185 = vadd.xlane.f32.xlu0 %v2184
  %v2186 = vpop.xlane.xlu0 %2185
  %v2187 = vsel %vm1714, %v2141, 0.0
  %2188 = vadd.xlane.f32.xlu0 %v2187
  %v2189 = vpop.xlane.xlu0 %2188
  %v2190 = vmul.f32 %v2144, %v1763
  %v2191 = vmul.f32 %v2147, %v1763
  %v2192 = vmul.f32 %v2150, %v1763
  %v2193 = vmul.f32 %v2153, %v1763
  %v2194 = vmul.f32 %v2156, %v1763
  %v2195 = vmul.f32 %v2159, %v1763
  %v2196 = vmul.f32 %v2162, %v1763
  %v2197 = vmul.f32 %v2165, %v1763
  %v2198 = vmul.f32 %v2168, %v1763
  %v2199 = vmul.f32 %v2171, %v1763
  %v2200 = vmul.f32 %v2174, %v1763
  %v2201 = vmul.f32 %v2177, %v1763
  %v2202 = vmul.f32 %v2180, %v1763
  %v2203 = vmul.f32 %v2183, %v1763
  %v2204 = vmul.f32 %v2186, %v1763
  %v2205 = vmul.f32 %v2189, %v1763
  %v2206 = vsub.f32 %v2126, %v2190
  %v2207 = vsub.f32 %v2127, %v2191
  %v2208 = vsub.f32 %v2128, %v2192
  %v2209 = vsub.f32 %v2129, %v2193
  %v2210 = vsub.f32 %v2130, %v2194
  %v2211 = vsub.f32 %v2131, %v2195
  %v2212 = vsub.f32 %v2132, %v2196
  %v2213 = vsub.f32 %v2133, %v2197
  %v2214 = vsub.f32 %v2134, %v2198
  %v2215 = vsub.f32 %v2135, %v2199
  %v2216 = vsub.f32 %v2136, %v2200
  %v2217 = vsub.f32 %v2137, %v2201
  %v2218 = vsub.f32 %v2138, %v2202
  %v2219 = vsub.f32 %v2139, %v2203
  %v2220 = vsub.f32 %v2140, %v2204
  %v2221 = vsub.f32 %v2141, %v2205
  %v2222 = vmul.f32 %v2206, %v2206
  %v2223 = vmul.f32 %v2207, %v2207
  %v2224 = vmul.f32 %v2208, %v2208
  %v2225 = vmul.f32 %v2209, %v2209
  %v2226 = vmul.f32 %v2210, %v2210
  %v2227 = vmul.f32 %v2211, %v2211
  %v2228 = vmul.f32 %v2212, %v2212
  %v2229 = vmul.f32 %v2213, %v2213
  %v2230 = vmul.f32 %v2214, %v2214
  %v2231 = vmul.f32 %v2215, %v2215
  %v2232 = vmul.f32 %v2216, %v2216
  %v2233 = vmul.f32 %v2217, %v2217
  %v2234 = vmul.f32 %v2218, %v2218
  %v2235 = vmul.f32 %v2219, %v2219
  %v2236 = vmul.f32 %v2220, %v2220
  %v2237 = vmul.f32 %v2221, %v2221
  %v2238 = vsel %vm1714, %v2222, 0.0
  %2239 = vadd.xlane.f32.xlu0 %v2238
  %v2240 = vpop.xlane.xlu0 %2239
  %v2241 = vsel %vm1714, %v2223, 0.0
  %2242 = vadd.xlane.f32.xlu0 %v2241
  %v2243 = vpop.xlane.xlu0 %2242
  %v2244 = vsel %vm1714, %v2224, 0.0
  %2245 = vadd.xlane.f32.xlu0 %v2244
  %v2246 = vpop.xlane.xlu0 %2245
  %v2247 = vsel %vm1714, %v2225, 0.0
  %2248 = vadd.xlane.f32.xlu0 %v2247
  %v2249 = vpop.xlane.xlu0 %2248
  %v2250 = vsel %vm1714, %v2226, 0.0
  %2251 = vadd.xlane.f32.xlu0 %v2250
  %v2252 = vpop.xlane.xlu0 %2251
  %v2253 = vsel %vm1714, %v2227, 0.0
  %2254 = vadd.xlane.f32.xlu0 %v2253
  %v2255 = vpop.xlane.xlu0 %2254
  %v2256 = vsel %vm1714, %v2228, 0.0
  %2257 = vadd.xlane.f32.xlu0 %v2256
  %v2258 = vpop.xlane.xlu0 %2257
  %v2259 = vsel %vm1714, %v2229, 0.0
  %2260 = vadd.xlane.f32.xlu0 %v2259
  %v2261 = vpop.xlane.xlu0 %2260
  %v2262 = vsel %vm1714, %v2230, 0.0
  %2263 = vadd.xlane.f32.xlu0 %v2262
  %v2264 = vpop.xlane.xlu0 %2263
  %v2265 = vsel %vm1714, %v2231, 0.0
  %2266 = vadd.xlane.f32.xlu0 %v2265
  %v2267 = vpop.xlane.xlu0 %2266
  %v2268 = vsel %vm1714, %v2232, 0.0
  %2269 = vadd.xlane.f32.xlu0 %v2268
  %v2270 = vpop.xlane.xlu0 %2269
  %v2271 = vsel %vm1714, %v2233, 0.0
  %2272 = vadd.xlane.f32.xlu0 %v2271
  %v2273 = vpop.xlane.xlu0 %2272
  %v2274 = vsel %vm1714, %v2234, 0.0
  %2275 = vadd.xlane.f32.xlu0 %v2274
  %v2276 = vpop.xlane.xlu0 %2275
  %v2277 = vsel %vm1714, %v2235, 0.0
  %2278 = vadd.xlane.f32.xlu0 %v2277
  %v2279 = vpop.xlane.xlu0 %2278
  %v2280 = vsel %vm1714, %v2236, 0.0
  %2281 = vadd.xlane.f32.xlu0 %v2280
  %v2282 = vpop.xlane.xlu0 %2281
  %v2283 = vsel %vm1714, %v2237, 0.0
  %2284 = vadd.xlane.f32.xlu0 %v2283
  %v2285 = vpop.xlane.xlu0 %2284
  %v2286 = vmul.f32 %v2240, %v1763
  %v2287 = vmul.f32 %v2243, %v1763
  %v2288 = vmul.f32 %v2246, %v1763
  %v2289 = vmul.f32 %v2249, %v1763
  %v2290 = vmul.f32 %v2252, %v1763
  %v2291 = vmul.f32 %v2255, %v1763
  %v2292 = vmul.f32 %v2258, %v1763
  %v2293 = vmul.f32 %v2261, %v1763
  %v2294 = vmul.f32 %v2264, %v1763
  %v2295 = vmul.f32 %v2267, %v1763
  %v2296 = vmul.f32 %v2270, %v1763
  %v2297 = vmul.f32 %v2273, %v1763
  %v2298 = vmul.f32 %v2276, %v1763
  %v2299 = vmul.f32 %v2279, %v1763
  %v2300 = vmul.f32 %v2282, %v1763
  %v2301 = vmul.f32 %v2285, %v1763
  %v2302 = vadd.f32 %v2286, 1e-05
  %v2303 = vadd.f32 %v2287, 1e-05
  %v2304 = vadd.f32 %v2288, 1e-05
  %v2305 = vadd.f32 %v2289, 1e-05
  %v2306 = vadd.f32 %v2290, 1e-05
  %v2307 = vadd.f32 %v2291, 1e-05
  %v2308 = vadd.f32 %v2292, 1e-05
  %v2309 = vadd.f32 %v2293, 1e-05
  %v2310 = vadd.f32 %v2294, 1e-05
  %v2311 = vadd.f32 %v2295, 1e-05
  %v2312 = vadd.f32 %v2296, 1e-05
  %v2313 = vadd.f32 %v2297, 1e-05
  %v2314 = vadd.f32 %v2298, 1e-05
  %v2315 = vadd.f32 %v2299, 1e-05
  %v2316 = vadd.f32 %v2300, 1e-05
  %v2317 = vadd.f32 %v2301, 1e-05
  %v2318 = vrsqrt.pop %v2302
  %v2319 = vrsqrt.pop %v2303
  %v2320 = vrsqrt.pop %v2304
  %v2321 = vrsqrt.pop %v2305
  %v2322 = vrsqrt.pop %v2306
  %v2323 = vrsqrt.pop %v2307
  %v2324 = vrsqrt.pop %v2308
  %v2325 = vrsqrt.pop %v2309
  %v2326 = vrsqrt.pop %v2310
  %v2327 = vrsqrt.pop %v2311
  %v2328 = vrsqrt.pop %v2312
  %v2329 = vrsqrt.pop %v2313
  %v2330 = vrsqrt.pop %v2314
  %v2331 = vrsqrt.pop %v2315
  %v2332 = vrsqrt.pop %v2316
  %v2333 = vrsqrt.pop %v2317
  %v2334 = vmul.f32 %v2206, %v2318
  %v2335 = vmul.f32 %v2207, %v2319
  %v2336 = vmul.f32 %v2208, %v2320
  %v2337 = vmul.f32 %v2209, %v2321
  %v2338 = vmul.f32 %v2210, %v2322
  %v2339 = vmul.f32 %v2211, %v2323
  %v2340 = vmul.f32 %v2212, %v2324
  %v2341 = vmul.f32 %v2213, %v2325
  %v2342 = vmul.f32 %v2214, %v2326
  %v2343 = vmul.f32 %v2215, %v2327
  %v2344 = vmul.f32 %v2216, %v2328
  %v2345 = vmul.f32 %v2217, %v2329
  %v2346 = vmul.f32 %v2218, %v2330
  %v2347 = vmul.f32 %v2219, %v2331
  %v2348 = vmul.f32 %v2220, %v2332
  %v2349 = vmul.f32 %v2221, %v2333
  %v2350 = vld [vmem:[%s4 + $0x4] sm:$0x1]
  %v2351 = vlaneseq
  %v2352 = vshrl.u32 %v2351, 7
  %v2353 = vsub.s32 0, %v2352
  %v2354 = vrot.slane %v2350, %v2353
  %v2355 = vmul.f32 %v2334, %v2354
  %v2356 = vmul.f32 %v2335, %v2354
  %v2357 = vmul.f32 %v2336, %v2354
  %v2358 = vmul.f32 %v2337, %v2354
  %v2359 = vmul.f32 %v2338, %v2354
  %v2360 = vmul.f32 %v2339, %v2354
  %v2361 = vmul.f32 %v2340, %v2354
  %v2362 = vmul.f32 %v2341, %v2354
  %v2363 = vmul.f32 %v2342, %v2354
  %v2364 = vmul.f32 %v2343, %v2354
  %v2365 = vmul.f32 %v2344, %v2354
  %v2366 = vmul.f32 %v2345, %v2354
  %v2367 = vmul.f32 %v2346, %v2354
  %v2368 = vmul.f32 %v2347, %v2354
  %v2369 = vmul.f32 %v2348, %v2354
  %v2370 = vmul.f32 %v2349, %v2354
  %v2371 = vld [vmem:[%s4 + $0x5] sm:$0x1]
  %v2372 = vlaneseq
  %v2373 = vshrl.u32 %v2372, 7
  %v2374 = vsub.s32 0, %v2373
  %v2375 = vrot.slane %v2371, %v2374
  %v2376 = vadd.f32 %v2355, %v2375
  %v2377 = vadd.f32 %v2356, %v2375
  %v2378 = vadd.f32 %v2357, %v2375
  %v2379 = vadd.f32 %v2358, %v2375
  %v2380 = vadd.f32 %v2359, %v2375
  %v2381 = vadd.f32 %v2360, %v2375
  %v2382 = vadd.f32 %v2361, %v2375
  %v2383 = vadd.f32 %v2362, %v2375
  %v2384 = vadd.f32 %v2363, %v2375
  %v2385 = vadd.f32 %v2364, %v2375
  %v2386 = vadd.f32 %v2365, %v2375
  %v2387 = vadd.f32 %v2366, %v2375
  %v2388 = vadd.f32 %v2367, %v2375
  %v2389 = vadd.f32 %v2368, %v2375
  %v2390 = vadd.f32 %v2369, %v2375
  %v2391 = vadd.f32 %v2370, %v2375
  %2392 = vst.msk [vmem:[%s5] sm:$0xff] %vm1714, %v2376
  %2393 = vst.msk [vmem:[%s5 + $0x8] sm:$0xff] %vm1714, %v2377
  %2394 = vst.msk [vmem:[%s5 + $0x10] sm:$0xff] %vm1714, %v2378
  %2395 = vst.msk [vmem:[%s5 + $0x18] sm:$0xff] %vm1714, %v2379
  %2396 = vst.msk [vmem:[%s5 + $0x20] sm:$0xff] %vm1714, %v2380
  %2397 = vst.msk [vmem:[%s5 + $0x28] sm:$0xff] %vm1714, %v2381
  %2398 = vst.msk [vmem:[%s5 + $0x30] sm:$0xff] %vm1714, %v2382
  %2399 = vst.msk [vmem:[%s5 + $0x38] sm:$0xff] %vm1714, %v2383
  %2400 = vst.msk [vmem:[%s5 + $0x40] sm:$0xff] %vm1714, %v2384
  %2401 = vst.msk [vmem:[%s5 + $0x48] sm:$0xff] %vm1714, %v2385
  %2402 = vst.msk [vmem:[%s5 + $0x50] sm:$0xff] %vm1714, %v2386
  %2403 = vst.msk [vmem:[%s5 + $0x58] sm:$0xff] %vm1714, %v2387
  %2404 = vst.msk [vmem:[%s5 + $0x60] sm:$0xff] %vm1714, %v2388
  %2405 = vst.msk [vmem:[%s5 + $0x68] sm:$0xff] %vm1714, %v2389
  %2406 = vst.msk [vmem:[%s5 + $0x70] sm:$0xff] %vm1714, %v2390
  %2407 = vst.msk [vmem:[%s5 + $0x78] sm:$0xff] %vm1714, %v2391
  // Predicated region
  $region22: #{_dof9_pallas.1} parent=0 // pred_check
    _
  $region23: #{_dof9_pallas.1} parent=0 // pred_check_branch
    %2409 = sbr.rel (0) target = $region25
  $region24: #{_dof9_pallas.1} parent=0 // pred_region
    _
  $region25: #{_dof9_pallas.1} parent=0 // pred_fallthru
    _
  // Predicated region
  $region26: #{_dof9_pallas.1} parent=0 // pred_check
    _
  $region27: #{_dof9_pallas.1} parent=0 // pred_check_branch
    %2411 = sbr.rel (0) target = $region29
  $region28: #{_dof9_pallas.1} parent=0 // pred_region
    _
  $region29: #{_dof9_pallas.1} parent=0 // pred_fallthru
    _

</llo_original>
